<compile_context>
chip_gen: v5e
topology: v5e:2x2
jax: 0.10.0
libtpu: 0.0.40
codegen_flags: <defaults>
</compile_context>

<pallas_src>
import jax
import jax.numpy as jnp
from jax.experimental import pallas as pl
from jax.experimental.pallas import tpu as pltpu

_EPS = 1e-5  # nn.InstanceNorm2d default eps


def _make_fused_kernel(H, W):
    P = H * W
    inv_p = 1.0 / P

    def kernel(x_ref, colw_ref, roww_ref, w3a_ref, w3b_ref, zb1_ref, zb2_ref,
               wa1_ref, wb1_ref, bb1_ref, wa2_ref, wb2_ref, bb2_ref, o_ref):
        # x_ref   : (1, C, P)    one sample, NCHW flattened, P on lanes
        # colw/roww: (1, P) int32  precomputed p % W and p // W (boundary masks)
        # w3a/w3b : (9, C, C)    conv3x3 weights, tap-major (kh*3+kw)
        # zb*     : (1, Ca, 1)   per-sample bias = Wa[:, C:] @ z + ba
        # wa*     : (Ca, C)      first 1x1 conv weight (activation part only)
        # wb*     : (C, Ca)      second 1x1 conv weight;  bb*: (C, 1) its bias
        # o_ref   : (1, C, P)
        x = x_ref[0].astype(jnp.float32)                      # (C, P)
        colw = colw_ref[...]                                  # (1, P)
        roww = roww_ref[...]                                  # (1, P)
        m_w0 = colw == 0
        m_wl = colw == (W - 1)
        m_h0 = roww == 0
        m_hl = roww == (H - 1)

        def build_taps(a):
            """Nine ReflectionPad2d(1) 3x3 taps of a (C, P) row-major map."""
            up = jnp.roll(a, W, axis=1)       # value from row h-1 (same w)
            down = jnp.roll(a, -W, axis=1)    # value from row h+1
            r0 = jnp.where(m_h0, down, up)    # kh=0: reflect h=-1 -> h=1
            r1 = a                            # kh=1
            r2 = jnp.where(m_hl, up, down)    # kh=2: reflect h=H  -> h=H-2
            taps = []
            for r in (r0, r1, r2):
                left = jnp.roll(r, 1, axis=1)     # value from w-1
                right = jnp.roll(r, -1, axis=1)   # value from w+1
                taps.append(jnp.where(m_w0, right, left))   # kw=0: reflect -> 1
                taps.append(r)                              # kw=1
                taps.append(jnp.where(m_wl, left, right))   # kw=2: reflect -> W-2
            return taps                                     # order kh*3 + kw

        def conv_in(a, w3_ref):
            """conv3x3 (bias dropped: cancelled by IN) + InstanceNorm2d."""
            taps = build_taps(a)
            acc = jnp.dot(w3_ref[0], taps[0],
                          preferred_element_type=jnp.float32)          # (C, P)
            for k in range(1, 9):
                acc = acc + jnp.dot(w3_ref[k], taps[k],
                                    preferred_element_type=jnp.float32)
            s1 = jnp.sum(acc, axis=-1, keepdims=True)                   # (C, 1)
            s2 = jnp.sum(acc * acc, axis=-1, keepdims=True)             # (C, 1)
            mean = s1 * inv_p
            var = jnp.maximum(s2 * inv_p - mean * mean, 0.0)
            return (acc - mean) * jax.lax.rsqrt(var + _EPS)             # (C, P)

        def blk(a, zb, wa_ref, wb_ref, bb_ref):
            """1x1 conv (+ folded z bias) -> ReLU -> 1x1 conv -> ReLU."""
            h = jnp.dot(wa_ref[...], a,
                        preferred_element_type=jnp.float32) + zb        # (Ca, P)
            h = jnp.maximum(h, 0.0)
            o = jnp.dot(wb_ref[...], h,
                        preferred_element_type=jnp.float32) + bb_ref[...]
            return jnp.maximum(o, 0.0)                                   # (C, P)

        o1 = conv_in(x, w3a_ref)
        o2 = blk(o1, zb1_ref[0], wa1_ref, wb1_ref, bb1_ref)
        o3 = conv_in(o2, w3b_ref)
        o4 = blk(o3, zb2_ref[0], wa2_ref, wb2_ref, bb2_ref)
        o_ref[0] = (o4 + x).astype(o_ref.dtype)

    return kernel


def mis_ins_res_block(x, z, p):
    """x: (N, C, H, W) NCHW float32, z: (N, Ce). Params p: see __main__.
    Note: p['b1'], p['b2'] (conv3x3 biases) are intentionally unused - they are
    cancelled exactly by the affine=False InstanceNorm that follows each conv."""
    N, C, H, W = x.shape
    Ce = z.shape[1]
    Ca = C + Ce
    P = H * W

    x_flat = x.reshape(N, C, P)                       # lane-dense per sample
    pidx = jnp.arange(P, dtype=jnp.int32)
    colw = (pidx % W).reshape(1, P)                   # p % W   (w coordinate)
    roww = (pidx // W).reshape(1, P)                  # p // W  (h coordinate)

    def w3_taps(w):   # (C, C, 3, 3) OIHW -> (9, C, C), tap index k = kh*3 + kw
        return jnp.transpose(w, (2, 3, 0, 1)).reshape(9, C, C)

    def z_bias(wa_full, ba):
        """Fold the z channels of the first 1x1 conv into a per-sample bias."""
        return (z @ wa_full[:, C:].T + ba[None, :]).reshape(N, Ca, 1)

    args = [
        x_flat, colw, roww,
        w3_taps(p["w1"]), w3_taps(p["w2"]),
        z_bias(p["wa1"], p["ba1"]), z_bias(p["wa2"], p["ba2"]),
        p["wa1"][:, :C], p["wb1"], p["bb1"].reshape(C, 1),
        p["wa2"][:, :C], p["wb2"], p["bb2"].reshape(C, 1),
    ]
    in_specs = [
        pl.BlockSpec((1, C, P), lambda n: (n, 0, 0)),     # x (per sample)
        pl.BlockSpec((1, P), lambda n: (0, 0)),           # colw
        pl.BlockSpec((1, P), lambda n: (0, 0)),           # roww
        pl.BlockSpec((9, C, C), lambda n: (0, 0, 0)),     # w3 stage 1
        pl.BlockSpec((9, C, C), lambda n: (0, 0, 0)),     # w3 stage 2
        pl.BlockSpec((1, Ca, 1), lambda n: (n, 0, 0)),    # z bias stage 1
        pl.BlockSpec((1, Ca, 1), lambda n: (n, 0, 0)),    # z bias stage 2
        pl.BlockSpec((Ca, C), lambda n: (0, 0)),          # wa1 (act part)
        pl.BlockSpec((C, Ca), lambda n: (0, 0)),          # wb1
        pl.BlockSpec((C, 1), lambda n: (0, 0)),           # bb1
        pl.BlockSpec((Ca, C), lambda n: (0, 0)),          # wa2 (act part)
        pl.BlockSpec((C, Ca), lambda n: (0, 0)),          # wb2
        pl.BlockSpec((C, 1), lambda n: (0, 0)),           # bb2
    ]
    out = pl.pallas_call(
        _make_fused_kernel(H, W),
        out_shape=jax.ShapeDtypeStruct((N, C, P), x.dtype),
        grid=(N,),
        in_specs=in_specs,
        out_specs=pl.BlockSpec((1, C, P), lambda n: (n, 0, 0)),
        compiler_params=pltpu.CompilerParams(
            dimension_semantics=("parallel",)),
    )(*args)
    return out.reshape(N, C, H, W)


# ---------------------------------------------------------------------------
# Pure-JAX reference (mirrors the PyTorch module exactly, biases included)
# ---------------------------------------------------------------------------
def _reference(x, z, p):
    N, C, H, W = x.shape
    Ce = z.shape[1]

    def conv3x3(a, w, b):
        ap = jnp.pad(a, ((0, 0), (0, 0), (1, 1), (1, 1)), mode="reflect")
        y = jax.lax.conv_general_dilated(
            ap, w, window_strides=(1, 1), padding="VALID",
            dimension_numbers=("NCHW", "OIHW", "NCHW"))
        return y + b[None, :, None, None]

    def inorm(a):
        m = jnp.mean(a, axis=(2, 3), keepdims=True)
        v = jnp.mean((a - m) ** 2, axis=(2, 3), keepdims=True)
        return (a - m) * jax.lax.rsqrt(v + _EPS)

    def blk(a, wa, ba, wb, bb):
        ze = jnp.broadcast_to(z[:, :, None, None], (N, Ce, H, W))
        cat = jnp.concatenate([a, ze], axis=1)
        h = jnp.maximum(
            jnp.einsum("oc,nchw->nohw", wa, cat) + ba[None, :, None, None], 0.0)
        o = jnp.maximum(
            jnp.einsum("oc,nchw->nohw", wb, h) + bb[None, :, None, None], 0.0)
        return o

    o1 = inorm(conv3x3(x, p["w1"], p["b1"]))
    o2 = blk(o1, p["wa1"], p["ba1"], p["wb1"], p["bb1"])
    o3 = inorm(conv3x3(o2, p["w2"], p["b2"]))
    o4 = blk(o3, p["wa2"], p["ba2"], p["wb2"], p["bb2"])
    return o4 + x


if __name__ == "__main__":
    # MisINSResBlock(dim=4, dim_extra=4), x: (2, 4, 16, 16), z: (2, 4)
    N, dim, dim_extra, H, W = 2, 4, 4, 16, 16
    Ca = dim + dim_extra

    key = jax.random.PRNGKey(0)
    ks = jax.random.split(key, 14)
    x = jax.random.normal(ks[0], (N, dim, H, W), jnp.float32)
    z = jax.random.normal(ks[1], (N, dim_extra), jnp.float32)

    def gw(k, shape):   # gaussian_weights_init: Conv weights ~ N(0, 0.02)
        return 0.02 * jax.random.normal(k, shape, jnp.float32)

    def gb(k, shape):   # deterministic synthetic biases
        return jax.random.uniform(k, shape, jnp.float32, -0.1, 0.1)

    params = dict(
        # conv1 / conv2: ReflectionPad(1) + Conv2d(dim, dim, 3) (OIHW weights)
        w1=gw(ks[2], (dim, dim, 3, 3)),  b1=gb(ks[3], (dim,)),
        w2=gw(ks[4], (dim, dim, 3, 3)),  b2=gb(ks[5], (dim,)),
        # blk1 / blk2: Conv1x1(dim+extra -> dim+extra), ReLU, Conv1x1(-> dim), ReLU
        wa1=gw(ks[6], (Ca, Ca)),  ba1=gb(ks[7], (Ca,)),
        wb1=gw(ks[8], (dim, Ca)), bb1=gb(ks[9], (dim,)),
        wa2=gw(ks[10], (Ca, Ca)),  ba2=gb(ks[11], (Ca,)),
        wb2=gw(ks[12], (dim, Ca)), bb2=gb(ks[13], (dim,)),
    )
    # note: the module's self.model (Dropout, p=0.0) is never applied in forward().

    out = mis_ins_res_block(x, z, params)
    out = jax.block_until_ready(out)

    ref = _reference(x, z, params)
    assert out.shape == (N, dim, H, W)
    # tolerance accommodates MXU default-precision matmuls vs XLA's conv lowering
    assert jnp.allclose(out, ref, atol=5e-3, rtol=5e-3), "mismatch vs. JAX reference"
    print("KERNEL_OK")
</pallas_src>

<mosaic_0001>
module attributes {stable_mosaic.version = 11 : i64} {
  func.func @kernel(%arg0: i32, %arg1: memref<1x4x256xf32, #tpu.memory_space<vmem>>, %arg2: memref<1x256xi32, #tpu.memory_space<vmem>>, %arg3: memref<1x256xi32, #tpu.memory_space<vmem>>, %arg4: memref<9x4x4xf32, #tpu.memory_space<vmem>>, %arg5: memref<9x4x4xf32, #tpu.memory_space<vmem>>, %arg6: memref<1x8x1xf32, #tpu.memory_space<vmem>>, %arg7: memref<1x8x1xf32, #tpu.memory_space<vmem>>, %arg8: memref<8x4xf32, #tpu.memory_space<vmem>>, %arg9: memref<4x8xf32, #tpu.memory_space<vmem>>, %arg10: memref<4x1xf32, #tpu.memory_space<vmem>>, %arg11: memref<8x4xf32, #tpu.memory_space<vmem>>, %arg12: memref<4x8xf32, #tpu.memory_space<vmem>>, %arg13: memref<4x1xf32, #tpu.memory_space<vmem>>, %arg14: memref<1x4x256xf32, #tpu.memory_space<vmem>>) attributes {dimension_semantics = [#tpu.dimension_semantics<parallel>], iteration_bounds = array<i64: 2>, scalar_prefetch = 0 : i64, scratch_operands = 0 : i64, tpu.core_type = #tpu.core_type<tc>, window_params = [{transform_indices = @transform_0, window_bounds = array<i64: 1, 4, 256>}, {pipeline_mode = #tpu.pipeline_mode<synchronous>, transform_indices = @transform_1, window_bounds = array<i64: 1, 256>}, {pipeline_mode = #tpu.pipeline_mode<synchronous>, transform_indices = @transform_2, window_bounds = array<i64: 1, 256>}, {pipeline_mode = #tpu.pipeline_mode<synchronous>, transform_indices = @transform_3, window_bounds = array<i64: 9, 4, 4>}, {pipeline_mode = #tpu.pipeline_mode<synchronous>, transform_indices = @transform_4, window_bounds = array<i64: 9, 4, 4>}, {transform_indices = @transform_5, window_bounds = array<i64: 1, 8, 1>}, {transform_indices = @transform_6, window_bounds = array<i64: 1, 8, 1>}, {pipeline_mode = #tpu.pipeline_mode<synchronous>, transform_indices = @transform_7, window_bounds = array<i64: 8, 4>}, {pipeline_mode = #tpu.pipeline_mode<synchronous>, transform_indices = @transform_8, window_bounds = array<i64: 4, 8>}, {pipeline_mode = #tpu.pipeline_mode<synchronous>, transform_indices = @transform_9, window_bounds = array<i64: 4, 1>}, {pipeline_mode = #tpu.pipeline_mode<synchronous>, transform_indices = @transform_10, window_bounds = array<i64: 8, 4>}, {pipeline_mode = #tpu.pipeline_mode<synchronous>, transform_indices = @transform_11, window_bounds = array<i64: 4, 8>}, {pipeline_mode = #tpu.pipeline_mode<synchronous>, transform_indices = @transform_12, window_bounds = array<i64: 4, 1>}, {transform_indices = @transform_13, window_bounds = array<i64: 1, 4, 256>}]} {
    %c0 = arith.constant 0 : index
    %c0_0 = arith.constant 0 : index
    %c0_1 = arith.constant 0 : index
    %0 = vector.load %arg1[%c0, %c0_0, %c0_1] : memref<1x4x256xf32, #tpu.memory_space<vmem>>, vector<1x4x256xf32>
    %1 = vector.shape_cast %0 : vector<1x4x256xf32> to vector<4x256xf32>
    %c0_2 = arith.constant 0 : index
    %c0_3 = arith.constant 0 : index
    %2 = vector.load %arg2[%c0_2, %c0_3] : memref<1x256xi32, #tpu.memory_space<vmem>>, vector<1x256xi32>
    %c0_4 = arith.constant 0 : index
    %c0_5 = arith.constant 0 : index
    %3 = vector.load %arg3[%c0_4, %c0_5] : memref<1x256xi32, #tpu.memory_space<vmem>>, vector<1x256xi32>
    %c0_i32 = arith.constant 0 : i32
    %4 = vector.broadcast %c0_i32 : i32 to vector<1x256xi32>
    %5 = arith.cmpi eq, %2, %4 : vector<1x256xi32>
    %c15_i32 = arith.constant 15 : i32
    %6 = vector.broadcast %c15_i32 : i32 to vector<1x256xi32>
    %7 = arith.cmpi eq, %2, %6 : vector<1x256xi32>
    %c0_i32_6 = arith.constant 0 : i32
    %8 = vector.broadcast %c0_i32_6 : i32 to vector<1x256xi32>
    %9 = arith.cmpi eq, %3, %8 : vector<1x256xi32>
    %c15_i32_7 = arith.constant 15 : i32
    %10 = vector.broadcast %c15_i32_7 : i32 to vector<1x256xi32>
    %11 = arith.cmpi eq, %3, %10 : vector<1x256xi32>
    %12 = vector.extract_strided_slice %1 {offsets = [0, 240], sizes = [4, 16], strides = [1, 1]} : vector<4x256xf32> to vector<4x16xf32>
    %13 = vector.extract_strided_slice %1 {offsets = [0, 0], sizes = [4, 240], strides = [1, 1]} : vector<4x256xf32> to vector<4x240xf32>
    %14 = tpu.concatenate %12, %13 in 1 : vector<4x16xf32>, vector<4x240xf32> -> vector<4x256xf32>
    %15 = vector.extract_strided_slice %1 {offsets = [0, 16], sizes = [4, 240], strides = [1, 1]} : vector<4x256xf32> to vector<4x240xf32>
    %16 = vector.extract_strided_slice %1 {offsets = [0, 0], sizes = [4, 16], strides = [1, 1]} : vector<4x256xf32> to vector<4x16xf32>
    %17 = tpu.concatenate %15, %16 in 1 : vector<4x240xf32>, vector<4x16xf32> -> vector<4x256xf32>
    %18 = vector.shape_cast %9 : vector<1x256xi1> to vector<1x256xi1>
    %19 = vector.broadcast %18 : vector<1x256xi1> to vector<4x256xi1>
    %20 = arith.select %19, %17, %14 : vector<4x256xi1>, vector<4x256xf32>
    %21 = vector.shape_cast %11 : vector<1x256xi1> to vector<1x256xi1>
    %22 = vector.broadcast %21 : vector<1x256xi1> to vector<4x256xi1>
    %23 = arith.select %22, %14, %17 : vector<4x256xi1>, vector<4x256xf32>
    %24 = vector.extract_strided_slice %20 {offsets = [0, 255], sizes = [4, 1], strides = [1, 1]} : vector<4x256xf32> to vector<4x1xf32>
    %25 = vector.extract_strided_slice %20 {offsets = [0, 0], sizes = [4, 255], strides = [1, 1]} : vector<4x256xf32> to vector<4x255xf32>
    %26 = tpu.concatenate %24, %25 in 1 : vector<4x1xf32>, vector<4x255xf32> -> vector<4x256xf32>
    %27 = vector.extract_strided_slice %20 {offsets = [0, 1], sizes = [4, 255], strides = [1, 1]} : vector<4x256xf32> to vector<4x255xf32>
    %28 = vector.extract_strided_slice %20 {offsets = [0, 0], sizes = [4, 1], strides = [1, 1]} : vector<4x256xf32> to vector<4x1xf32>
    %29 = tpu.concatenate %27, %28 in 1 : vector<4x255xf32>, vector<4x1xf32> -> vector<4x256xf32>
    %30 = vector.shape_cast %5 : vector<1x256xi1> to vector<1x256xi1>
    %31 = vector.broadcast %30 : vector<1x256xi1> to vector<4x256xi1>
    %32 = arith.select %31, %29, %26 : vector<4x256xi1>, vector<4x256xf32>
    %33 = vector.shape_cast %7 : vector<1x256xi1> to vector<1x256xi1>
    %34 = vector.broadcast %33 : vector<1x256xi1> to vector<4x256xi1>
    %35 = arith.select %34, %26, %29 : vector<4x256xi1>, vector<4x256xf32>
    %36 = vector.extract_strided_slice %1 {offsets = [0, 255], sizes = [4, 1], strides = [1, 1]} : vector<4x256xf32> to vector<4x1xf32>
    %37 = vector.extract_strided_slice %1 {offsets = [0, 0], sizes = [4, 255], strides = [1, 1]} : vector<4x256xf32> to vector<4x255xf32>
    %38 = tpu.concatenate %36, %37 in 1 : vector<4x1xf32>, vector<4x255xf32> -> vector<4x256xf32>
    %39 = vector.extract_strided_slice %1 {offsets = [0, 1], sizes = [4, 255], strides = [1, 1]} : vector<4x256xf32> to vector<4x255xf32>
    %40 = vector.extract_strided_slice %1 {offsets = [0, 0], sizes = [4, 1], strides = [1, 1]} : vector<4x256xf32> to vector<4x1xf32>
    %41 = tpu.concatenate %39, %40 in 1 : vector<4x255xf32>, vector<4x1xf32> -> vector<4x256xf32>
    %42 = vector.shape_cast %5 : vector<1x256xi1> to vector<1x256xi1>
    %43 = vector.broadcast %42 : vector<1x256xi1> to vector<4x256xi1>
    %44 = arith.select %43, %41, %38 : vector<4x256xi1>, vector<4x256xf32>
    %45 = vector.shape_cast %7 : vector<1x256xi1> to vector<1x256xi1>
    %46 = vector.broadcast %45 : vector<1x256xi1> to vector<4x256xi1>
    %47 = arith.select %46, %38, %41 : vector<4x256xi1>, vector<4x256xf32>
    %48 = vector.extract_strided_slice %23 {offsets = [0, 255], sizes = [4, 1], strides = [1, 1]} : vector<4x256xf32> to vector<4x1xf32>
    %49 = vector.extract_strided_slice %23 {offsets = [0, 0], sizes = [4, 255], strides = [1, 1]} : vector<4x256xf32> to vector<4x255xf32>
    %50 = tpu.concatenate %48, %49 in 1 : vector<4x1xf32>, vector<4x255xf32> -> vector<4x256xf32>
    %51 = vector.extract_strided_slice %23 {offsets = [0, 1], sizes = [4, 255], strides = [1, 1]} : vector<4x256xf32> to vector<4x255xf32>
    %52 = vector.extract_strided_slice %23 {offsets = [0, 0], sizes = [4, 1], strides = [1, 1]} : vector<4x256xf32> to vector<4x1xf32>
    %53 = tpu.concatenate %51, %52 in 1 : vector<4x255xf32>, vector<4x1xf32> -> vector<4x256xf32>
    %54 = vector.shape_cast %5 : vector<1x256xi1> to vector<1x256xi1>
    %55 = vector.broadcast %54 : vector<1x256xi1> to vector<4x256xi1>
    %56 = arith.select %55, %53, %50 : vector<4x256xi1>, vector<4x256xf32>
    %57 = vector.shape_cast %7 : vector<1x256xi1> to vector<1x256xi1>
    %58 = vector.broadcast %57 : vector<1x256xi1> to vector<4x256xi1>
    %59 = arith.select %58, %50, %53 : vector<4x256xi1>, vector<4x256xf32>
    %c0_8 = arith.constant 0 : index
    %c0_9 = arith.constant 0 : index
    %c0_10 = arith.constant 0 : index
    %60 = vector.load %arg4[%c0_8, %c0_9, %c0_10] : memref<9x4x4xf32, #tpu.memory_space<vmem>>, vector<1x4x4xf32>
    %61 = vector.shape_cast %60 : vector<1x4x4xf32> to vector<4x4xf32>
    %cst = arith.constant dense<0.000000e+00> : vector<4x256xf32>
    %62 = tpu.matmul %61, %32, %cst {dimension_numbers = #tpu.dot_dimension_numbers<[1], [0], [0], [1], [0, 0, 1, 1], [], []>} : vector<4x4xf32>, vector<4x256xf32>, vector<4x256xf32> -> vector<4x256xf32>
    %c1 = arith.constant 1 : index
    %c0_11 = arith.constant 0 : index
    %c0_12 = arith.constant 0 : index
    %63 = vector.load %arg4[%c1, %c0_11, %c0_12] : memref<9x4x4xf32, #tpu.memory_space<vmem>>, vector<1x4x4xf32>
    %64 = vector.shape_cast %63 : vector<1x4x4xf32> to vector<4x4xf32>
    %cst_13 = arith.constant dense<0.000000e+00> : vector<4x256xf32>
    %65 = tpu.matmul %64, %20, %cst_13 {dimension_numbers = #tpu.dot_dimension_numbers<[1], [0], [0], [1], [0, 0, 1, 1], [], []>} : vector<4x4xf32>, vector<4x256xf32>, vector<4x256xf32> -> vector<4x256xf32>
    %66 = arith.addf %62, %65 : vector<4x256xf32>
    %c2 = arith.constant 2 : index
    %c0_14 = arith.constant 0 : index
    %c0_15 = arith.constant 0 : index
    %67 = vector.load %arg4[%c2, %c0_14, %c0_15] : memref<9x4x4xf32, #tpu.memory_space<vmem>>, vector<1x4x4xf32>
    %68 = vector.shape_cast %67 : vector<1x4x4xf32> to vector<4x4xf32>
    %cst_16 = arith.constant dense<0.000000e+00> : vector<4x256xf32>
    %69 = tpu.matmul %68, %35, %cst_16 {dimension_numbers = #tpu.dot_dimension_numbers<[1], [0], [0], [1], [0, 0, 1, 1], [], []>} : vector<4x4xf32>, vector<4x256xf32>, vector<4x256xf32> -> vector<4x256xf32>
    %70 = arith.addf %66, %69 : vector<4x256xf32>
    %c3 = arith.constant 3 : index
    %c0_17 = arith.constant 0 : index
    %c0_18 = arith.constant 0 : index
    %71 = vector.load %arg4[%c3, %c0_17, %c0_18] : memref<9x4x4xf32, #tpu.memory_space<vmem>>, vector<1x4x4xf32>
    %72 = vector.shape_cast %71 : vector<1x4x4xf32> to vector<4x4xf32>
    %cst_19 = arith.constant dense<0.000000e+00> : vector<4x256xf32>
    %73 = tpu.matmul %72, %44, %cst_19 {dimension_numbers = #tpu.dot_dimension_numbers<[1], [0], [0], [1], [0, 0, 1, 1], [], []>} : vector<4x4xf32>, vector<4x256xf32>, vector<4x256xf32> -> vector<4x256xf32>
    %74 = arith.addf %70, %73 : vector<4x256xf32>
    %c4 = arith.constant 4 : index
    %c0_20 = arith.constant 0 : index
    %c0_21 = arith.constant 0 : index
    %75 = vector.load %arg4[%c4, %c0_20, %c0_21] : memref<9x4x4xf32, #tpu.memory_space<vmem>>, vector<1x4x4xf32>
    %76 = vector.shape_cast %75 : vector<1x4x4xf32> to vector<4x4xf32>
    %cst_22 = arith.constant dense<0.000000e+00> : vector<4x256xf32>
    %77 = tpu.matmul %76, %1, %cst_22 {dimension_numbers = #tpu.dot_dimension_numbers<[1], [0], [0], [1], [0, 0, 1, 1], [], []>} : vector<4x4xf32>, vector<4x256xf32>, vector<4x256xf32> -> vector<4x256xf32>
    %78 = arith.addf %74, %77 : vector<4x256xf32>
    %c5 = arith.constant 5 : index
    %c0_23 = arith.constant 0 : index
    %c0_24 = arith.constant 0 : index
    %79 = vector.load %arg4[%c5, %c0_23, %c0_24] : memref<9x4x4xf32, #tpu.memory_space<vmem>>, vector<1x4x4xf32>
    %80 = vector.shape_cast %79 : vector<1x4x4xf32> to vector<4x4xf32>
    %cst_25 = arith.constant dense<0.000000e+00> : vector<4x256xf32>
    %81 = tpu.matmul %80, %47, %cst_25 {dimension_numbers = #tpu.dot_dimension_numbers<[1], [0], [0], [1], [0, 0, 1, 1], [], []>} : vector<4x4xf32>, vector<4x256xf32>, vector<4x256xf32> -> vector<4x256xf32>
    %82 = arith.addf %78, %81 : vector<4x256xf32>
    %c6 = arith.constant 6 : index
    %c0_26 = arith.constant 0 : index
    %c0_27 = arith.constant 0 : index
    %83 = vector.load %arg4[%c6, %c0_26, %c0_27] : memref<9x4x4xf32, #tpu.memory_space<vmem>>, vector<1x4x4xf32>
    %84 = vector.shape_cast %83 : vector<1x4x4xf32> to vector<4x4xf32>
    %cst_28 = arith.constant dense<0.000000e+00> : vector<4x256xf32>
    %85 = tpu.matmul %84, %56, %cst_28 {dimension_numbers = #tpu.dot_dimension_numbers<[1], [0], [0], [1], [0, 0, 1, 1], [], []>} : vector<4x4xf32>, vector<4x256xf32>, vector<4x256xf32> -> vector<4x256xf32>
    %86 = arith.addf %82, %85 : vector<4x256xf32>
    %c7 = arith.constant 7 : index
    %c0_29 = arith.constant 0 : index
    %c0_30 = arith.constant 0 : index
    %87 = vector.load %arg4[%c7, %c0_29, %c0_30] : memref<9x4x4xf32, #tpu.memory_space<vmem>>, vector<1x4x4xf32>
    %88 = vector.shape_cast %87 : vector<1x4x4xf32> to vector<4x4xf32>
    %cst_31 = arith.constant dense<0.000000e+00> : vector<4x256xf32>
    %89 = tpu.matmul %88, %23, %cst_31 {dimension_numbers = #tpu.dot_dimension_numbers<[1], [0], [0], [1], [0, 0, 1, 1], [], []>} : vector<4x4xf32>, vector<4x256xf32>, vector<4x256xf32> -> vector<4x256xf32>
    %90 = arith.addf %86, %89 : vector<4x256xf32>
    %c8 = arith.constant 8 : index
    %c0_32 = arith.constant 0 : index
    %c0_33 = arith.constant 0 : index
    %91 = vector.load %arg4[%c8, %c0_32, %c0_33] : memref<9x4x4xf32, #tpu.memory_space<vmem>>, vector<1x4x4xf32>
    %92 = vector.shape_cast %91 : vector<1x4x4xf32> to vector<4x4xf32>
    %cst_34 = arith.constant dense<0.000000e+00> : vector<4x256xf32>
    %93 = tpu.matmul %92, %59, %cst_34 {dimension_numbers = #tpu.dot_dimension_numbers<[1], [0], [0], [1], [0, 0, 1, 1], [], []>} : vector<4x4xf32>, vector<4x256xf32>, vector<4x256xf32> -> vector<4x256xf32>
    %94 = arith.addf %90, %93 : vector<4x256xf32>
    %cst_35 = arith.constant dense<0.000000e+00> : vector<4xf32>
    %95 = vector.multi_reduction <add>, %94, %cst_35 [1] : vector<4x256xf32> to vector<4xf32>
    %96 = vector.shape_cast %95 : vector<4xf32> to vector<4x1xf32>
    %97 = arith.mulf %94, %94 : vector<4x256xf32>
    %cst_36 = arith.constant dense<0.000000e+00> : vector<4xf32>
    %98 = vector.multi_reduction <add>, %97, %cst_36 [1] : vector<4x256xf32> to vector<4xf32>
    %99 = vector.shape_cast %98 : vector<4xf32> to vector<4x1xf32>
    %cst_37 = arith.constant 3.906250e-03 : f32
    %100 = vector.broadcast %cst_37 : f32 to vector<4x1xf32>
    %101 = arith.mulf %96, %100 : vector<4x1xf32>
    %cst_38 = arith.constant 3.906250e-03 : f32
    %102 = vector.broadcast %cst_38 : f32 to vector<4x1xf32>
    %103 = arith.mulf %99, %102 : vector<4x1xf32>
    %104 = arith.mulf %101, %101 : vector<4x1xf32>
    %105 = arith.subf %103, %104 : vector<4x1xf32>
    %cst_39 = arith.constant 0.000000e+00 : f32
    %106 = vector.broadcast %cst_39 : f32 to vector<4x1xf32>
    %107 = arith.maximumf %105, %106 : vector<4x1xf32>
    %108 = vector.broadcast %101 : vector<4x1xf32> to vector<4x256xf32>
    %109 = arith.subf %94, %108 : vector<4x256xf32>
    %cst_40 = arith.constant 9.99999974E-6 : f32
    %110 = vector.broadcast %cst_40 : f32 to vector<4x1xf32>
    %111 = arith.addf %107, %110 : vector<4x1xf32>
    %112 = math.rsqrt %111 : vector<4x1xf32>
    %113 = vector.broadcast %112 : vector<4x1xf32> to vector<4x256xf32>
    %114 = arith.mulf %109, %113 : vector<4x256xf32>
    %c0_41 = arith.constant 0 : index
    %c0_42 = arith.constant 0 : index
    %c0_43 = arith.constant 0 : index
    %115 = vector.load %arg6[%c0_41, %c0_42, %c0_43] : memref<1x8x1xf32, #tpu.memory_space<vmem>>, vector<1x8x1xf32>
    %116 = vector.shape_cast %115 : vector<1x8x1xf32> to vector<8x1xf32>
    %c0_44 = arith.constant 0 : index
    %c0_45 = arith.constant 0 : index
    %117 = vector.load %arg8[%c0_44, %c0_45] : memref<8x4xf32, #tpu.memory_space<vmem>>, vector<8x4xf32>
    %cst_46 = arith.constant dense<0.000000e+00> : vector<8x256xf32>
    %118 = tpu.matmul %117, %114, %cst_46 {dimension_numbers = #tpu.dot_dimension_numbers<[1], [0], [0], [1], [0, 0, 1, 1], [], []>} : vector<8x4xf32>, vector<4x256xf32>, vector<8x256xf32> -> vector<8x256xf32>
    %119 = vector.broadcast %116 : vector<8x1xf32> to vector<8x256xf32>
    %120 = arith.addf %118, %119 : vector<8x256xf32>
    %cst_47 = arith.constant 0.000000e+00 : f32
    %121 = vector.broadcast %cst_47 : f32 to vector<8x256xf32>
    %122 = arith.maximumf %120, %121 : vector<8x256xf32>
    %c0_48 = arith.constant 0 : index
    %c0_49 = arith.constant 0 : index
    %123 = vector.load %arg9[%c0_48, %c0_49] : memref<4x8xf32, #tpu.memory_space<vmem>>, vector<4x8xf32>
    %cst_50 = arith.constant dense<0.000000e+00> : vector<4x256xf32>
    %124 = tpu.matmul %123, %122, %cst_50 {dimension_numbers = #tpu.dot_dimension_numbers<[1], [0], [0], [1], [0, 0, 1, 1], [], []>} : vector<4x8xf32>, vector<8x256xf32>, vector<4x256xf32> -> vector<4x256xf32>
    %c0_51 = arith.constant 0 : index
    %c0_52 = arith.constant 0 : index
    %125 = vector.load %arg10[%c0_51, %c0_52] : memref<4x1xf32, #tpu.memory_space<vmem>>, vector<4x1xf32>
    %126 = vector.broadcast %125 : vector<4x1xf32> to vector<4x256xf32>
    %127 = arith.addf %124, %126 : vector<4x256xf32>
    %cst_53 = arith.constant 0.000000e+00 : f32
    %128 = vector.broadcast %cst_53 : f32 to vector<4x256xf32>
    %129 = arith.maximumf %127, %128 : vector<4x256xf32>
    %130 = vector.extract_strided_slice %129 {offsets = [0, 240], sizes = [4, 16], strides = [1, 1]} : vector<4x256xf32> to vector<4x16xf32>
    %131 = vector.extract_strided_slice %129 {offsets = [0, 0], sizes = [4, 240], strides = [1, 1]} : vector<4x256xf32> to vector<4x240xf32>
    %132 = tpu.concatenate %130, %131 in 1 : vector<4x16xf32>, vector<4x240xf32> -> vector<4x256xf32>
    %133 = vector.extract_strided_slice %129 {offsets = [0, 16], sizes = [4, 240], strides = [1, 1]} : vector<4x256xf32> to vector<4x240xf32>
    %134 = vector.extract_strided_slice %129 {offsets = [0, 0], sizes = [4, 16], strides = [1, 1]} : vector<4x256xf32> to vector<4x16xf32>
    %135 = tpu.concatenate %133, %134 in 1 : vector<4x240xf32>, vector<4x16xf32> -> vector<4x256xf32>
    %136 = vector.shape_cast %9 : vector<1x256xi1> to vector<1x256xi1>
    %137 = vector.broadcast %136 : vector<1x256xi1> to vector<4x256xi1>
    %138 = arith.select %137, %135, %132 : vector<4x256xi1>, vector<4x256xf32>
    %139 = vector.shape_cast %11 : vector<1x256xi1> to vector<1x256xi1>
    %140 = vector.broadcast %139 : vector<1x256xi1> to vector<4x256xi1>
    %141 = arith.select %140, %132, %135 : vector<4x256xi1>, vector<4x256xf32>
    %142 = vector.extract_strided_slice %138 {offsets = [0, 255], sizes = [4, 1], strides = [1, 1]} : vector<4x256xf32> to vector<4x1xf32>
    %143 = vector.extract_strided_slice %138 {offsets = [0, 0], sizes = [4, 255], strides = [1, 1]} : vector<4x256xf32> to vector<4x255xf32>
    %144 = tpu.concatenate %142, %143 in 1 : vector<4x1xf32>, vector<4x255xf32> -> vector<4x256xf32>
    %145 = vector.extract_strided_slice %138 {offsets = [0, 1], sizes = [4, 255], strides = [1, 1]} : vector<4x256xf32> to vector<4x255xf32>
    %146 = vector.extract_strided_slice %138 {offsets = [0, 0], sizes = [4, 1], strides = [1, 1]} : vector<4x256xf32> to vector<4x1xf32>
    %147 = tpu.concatenate %145, %146 in 1 : vector<4x255xf32>, vector<4x1xf32> -> vector<4x256xf32>
    %148 = vector.shape_cast %5 : vector<1x256xi1> to vector<1x256xi1>
    %149 = vector.broadcast %148 : vector<1x256xi1> to vector<4x256xi1>
    %150 = arith.select %149, %147, %144 : vector<4x256xi1>, vector<4x256xf32>
    %151 = vector.shape_cast %7 : vector<1x256xi1> to vector<1x256xi1>
    %152 = vector.broadcast %151 : vector<1x256xi1> to vector<4x256xi1>
    %153 = arith.select %152, %144, %147 : vector<4x256xi1>, vector<4x256xf32>
    %154 = vector.extract_strided_slice %129 {offsets = [0, 255], sizes = [4, 1], strides = [1, 1]} : vector<4x256xf32> to vector<4x1xf32>
    %155 = vector.extract_strided_slice %129 {offsets = [0, 0], sizes = [4, 255], strides = [1, 1]} : vector<4x256xf32> to vector<4x255xf32>
    %156 = tpu.concatenate %154, %155 in 1 : vector<4x1xf32>, vector<4x255xf32> -> vector<4x256xf32>
    %157 = vector.extract_strided_slice %129 {offsets = [0, 1], sizes = [4, 255], strides = [1, 1]} : vector<4x256xf32> to vector<4x255xf32>
    %158 = vector.extract_strided_slice %129 {offsets = [0, 0], sizes = [4, 1], strides = [1, 1]} : vector<4x256xf32> to vector<4x1xf32>
    %159 = tpu.concatenate %157, %158 in 1 : vector<4x255xf32>, vector<4x1xf32> -> vector<4x256xf32>
    %160 = vector.shape_cast %5 : vector<1x256xi1> to vector<1x256xi1>
    %161 = vector.broadcast %160 : vector<1x256xi1> to vector<4x256xi1>
    %162 = arith.select %161, %159, %156 : vector<4x256xi1>, vector<4x256xf32>
    %163 = vector.shape_cast %7 : vector<1x256xi1> to vector<1x256xi1>
    %164 = vector.broadcast %163 : vector<1x256xi1> to vector<4x256xi1>
    %165 = arith.select %164, %156, %159 : vector<4x256xi1>, vector<4x256xf32>
    %166 = vector.extract_strided_slice %141 {offsets = [0, 255], sizes = [4, 1], strides = [1, 1]} : vector<4x256xf32> to vector<4x1xf32>
    %167 = vector.extract_strided_slice %141 {offsets = [0, 0], sizes = [4, 255], strides = [1, 1]} : vector<4x256xf32> to vector<4x255xf32>
    %168 = tpu.concatenate %166, %167 in 1 : vector<4x1xf32>, vector<4x255xf32> -> vector<4x256xf32>
    %169 = vector.extract_strided_slice %141 {offsets = [0, 1], sizes = [4, 255], strides = [1, 1]} : vector<4x256xf32> to vector<4x255xf32>
    %170 = vector.extract_strided_slice %141 {offsets = [0, 0], sizes = [4, 1], strides = [1, 1]} : vector<4x256xf32> to vector<4x1xf32>
    %171 = tpu.concatenate %169, %170 in 1 : vector<4x255xf32>, vector<4x1xf32> -> vector<4x256xf32>
    %172 = vector.shape_cast %5 : vector<1x256xi1> to vector<1x256xi1>
    %173 = vector.broadcast %172 : vector<1x256xi1> to vector<4x256xi1>
    %174 = arith.select %173, %171, %168 : vector<4x256xi1>, vector<4x256xf32>
    %175 = vector.shape_cast %7 : vector<1x256xi1> to vector<1x256xi1>
    %176 = vector.broadcast %175 : vector<1x256xi1> to vector<4x256xi1>
    %177 = arith.select %176, %168, %171 : vector<4x256xi1>, vector<4x256xf32>
    %c0_54 = arith.constant 0 : index
    %c0_55 = arith.constant 0 : index
    %c0_56 = arith.constant 0 : index
    %178 = vector.load %arg5[%c0_54, %c0_55, %c0_56] : memref<9x4x4xf32, #tpu.memory_space<vmem>>, vector<1x4x4xf32>
    %179 = vector.shape_cast %178 : vector<1x4x4xf32> to vector<4x4xf32>
    %cst_57 = arith.constant dense<0.000000e+00> : vector<4x256xf32>
    %180 = tpu.matmul %179, %150, %cst_57 {dimension_numbers = #tpu.dot_dimension_numbers<[1], [0], [0], [1], [0, 0, 1, 1], [], []>} : vector<4x4xf32>, vector<4x256xf32>, vector<4x256xf32> -> vector<4x256xf32>
    %c1_58 = arith.constant 1 : index
    %c0_59 = arith.constant 0 : index
    %c0_60 = arith.constant 0 : index
    %181 = vector.load %arg5[%c1_58, %c0_59, %c0_60] : memref<9x4x4xf32, #tpu.memory_space<vmem>>, vector<1x4x4xf32>
    %182 = vector.shape_cast %181 : vector<1x4x4xf32> to vector<4x4xf32>
    %cst_61 = arith.constant dense<0.000000e+00> : vector<4x256xf32>
    %183 = tpu.matmul %182, %138, %cst_61 {dimension_numbers = #tpu.dot_dimension_numbers<[1], [0], [0], [1], [0, 0, 1, 1], [], []>} : vector<4x4xf32>, vector<4x256xf32>, vector<4x256xf32> -> vector<4x256xf32>
    %184 = arith.addf %180, %183 : vector<4x256xf32>
    %c2_62 = arith.constant 2 : index
    %c0_63 = arith.constant 0 : index
    %c0_64 = arith.constant 0 : index
    %185 = vector.load %arg5[%c2_62, %c0_63, %c0_64] : memref<9x4x4xf32, #tpu.memory_space<vmem>>, vector<1x4x4xf32>
    %186 = vector.shape_cast %185 : vector<1x4x4xf32> to vector<4x4xf32>
    %cst_65 = arith.constant dense<0.000000e+00> : vector<4x256xf32>
    %187 = tpu.matmul %186, %153, %cst_65 {dimension_numbers = #tpu.dot_dimension_numbers<[1], [0], [0], [1], [0, 0, 1, 1], [], []>} : vector<4x4xf32>, vector<4x256xf32>, vector<4x256xf32> -> vector<4x256xf32>
    %188 = arith.addf %184, %187 : vector<4x256xf32>
    %c3_66 = arith.constant 3 : index
    %c0_67 = arith.constant 0 : index
    %c0_68 = arith.constant 0 : index
    %189 = vector.load %arg5[%c3_66, %c0_67, %c0_68] : memref<9x4x4xf32, #tpu.memory_space<vmem>>, vector<1x4x4xf32>
    %190 = vector.shape_cast %189 : vector<1x4x4xf32> to vector<4x4xf32>
    %cst_69 = arith.constant dense<0.000000e+00> : vector<4x256xf32>
    %191 = tpu.matmul %190, %162, %cst_69 {dimension_numbers = #tpu.dot_dimension_numbers<[1], [0], [0], [1], [0, 0, 1, 1], [], []>} : vector<4x4xf32>, vector<4x256xf32>, vector<4x256xf32> -> vector<4x256xf32>
    %192 = arith.addf %188, %191 : vector<4x256xf32>
    %c4_70 = arith.constant 4 : index
    %c0_71 = arith.constant 0 : index
    %c0_72 = arith.constant 0 : index
    %193 = vector.load %arg5[%c4_70, %c0_71, %c0_72] : memref<9x4x4xf32, #tpu.memory_space<vmem>>, vector<1x4x4xf32>
    %194 = vector.shape_cast %193 : vector<1x4x4xf32> to vector<4x4xf32>
    %cst_73 = arith.constant dense<0.000000e+00> : vector<4x256xf32>
    %195 = tpu.matmul %194, %129, %cst_73 {dimension_numbers = #tpu.dot_dimension_numbers<[1], [0], [0], [1], [0, 0, 1, 1], [], []>} : vector<4x4xf32>, vector<4x256xf32>, vector<4x256xf32> -> vector<4x256xf32>
    %196 = arith.addf %192, %195 : vector<4x256xf32>
    %c5_74 = arith.constant 5 : index
    %c0_75 = arith.constant 0 : index
    %c0_76 = arith.constant 0 : index
    %197 = vector.load %arg5[%c5_74, %c0_75, %c0_76] : memref<9x4x4xf32, #tpu.memory_space<vmem>>, vector<1x4x4xf32>
    %198 = vector.shape_cast %197 : vector<1x4x4xf32> to vector<4x4xf32>
    %cst_77 = arith.constant dense<0.000000e+00> : vector<4x256xf32>
    %199 = tpu.matmul %198, %165, %cst_77 {dimension_numbers = #tpu.dot_dimension_numbers<[1], [0], [0], [1], [0, 0, 1, 1], [], []>} : vector<4x4xf32>, vector<4x256xf32>, vector<4x256xf32> -> vector<4x256xf32>
    %200 = arith.addf %196, %199 : vector<4x256xf32>
    %c6_78 = arith.constant 6 : index
    %c0_79 = arith.constant 0 : index
    %c0_80 = arith.constant 0 : index
    %201 = vector.load %arg5[%c6_78, %c0_79, %c0_80] : memref<9x4x4xf32, #tpu.memory_space<vmem>>, vector<1x4x4xf32>
    %202 = vector.shape_cast %201 : vector<1x4x4xf32> to vector<4x4xf32>
    %cst_81 = arith.constant dense<0.000000e+00> : vector<4x256xf32>
    %203 = tpu.matmul %202, %174, %cst_81 {dimension_numbers = #tpu.dot_dimension_numbers<[1], [0], [0], [1], [0, 0, 1, 1], [], []>} : vector<4x4xf32>, vector<4x256xf32>, vector<4x256xf32> -> vector<4x256xf32>
    %204 = arith.addf %200, %203 : vector<4x256xf32>
    %c7_82 = arith.constant 7 : index
    %c0_83 = arith.constant 0 : index
    %c0_84 = arith.constant 0 : index
    %205 = vector.load %arg5[%c7_82, %c0_83, %c0_84] : memref<9x4x4xf32, #tpu.memory_space<vmem>>, vector<1x4x4xf32>
    %206 = vector.shape_cast %205 : vector<1x4x4xf32> to vector<4x4xf32>
    %cst_85 = arith.constant dense<0.000000e+00> : vector<4x256xf32>
    %207 = tpu.matmul %206, %141, %cst_85 {dimension_numbers = #tpu.dot_dimension_numbers<[1], [0], [0], [1], [0, 0, 1, 1], [], []>} : vector<4x4xf32>, vector<4x256xf32>, vector<4x256xf32> -> vector<4x256xf32>
    %208 = arith.addf %204, %207 : vector<4x256xf32>
    %c8_86 = arith.constant 8 : index
    %c0_87 = arith.constant 0 : index
    %c0_88 = arith.constant 0 : index
    %209 = vector.load %arg5[%c8_86, %c0_87, %c0_88] : memref<9x4x4xf32, #tpu.memory_space<vmem>>, vector<1x4x4xf32>
    %210 = vector.shape_cast %209 : vector<1x4x4xf32> to vector<4x4xf32>
    %cst_89 = arith.constant dense<0.000000e+00> : vector<4x256xf32>
    %211 = tpu.matmul %210, %177, %cst_89 {dimension_numbers = #tpu.dot_dimension_numbers<[1], [0], [0], [1], [0, 0, 1, 1], [], []>} : vector<4x4xf32>, vector<4x256xf32>, vector<4x256xf32> -> vector<4x256xf32>
    %212 = arith.addf %208, %211 : vector<4x256xf32>
    %cst_90 = arith.constant dense<0.000000e+00> : vector<4xf32>
    %213 = vector.multi_reduction <add>, %212, %cst_90 [1] : vector<4x256xf32> to vector<4xf32>
    %214 = vector.shape_cast %213 : vector<4xf32> to vector<4x1xf32>
    %215 = arith.mulf %212, %212 : vector<4x256xf32>
    %cst_91 = arith.constant dense<0.000000e+00> : vector<4xf32>
    %216 = vector.multi_reduction <add>, %215, %cst_91 [1] : vector<4x256xf32> to vector<4xf32>
    %217 = vector.shape_cast %216 : vector<4xf32> to vector<4x1xf32>
    %cst_92 = arith.constant 3.906250e-03 : f32
    %218 = vector.broadcast %cst_92 : f32 to vector<4x1xf32>
    %219 = arith.mulf %214, %218 : vector<4x1xf32>
    %cst_93 = arith.constant 3.906250e-03 : f32
    %220 = vector.broadcast %cst_93 : f32 to vector<4x1xf32>
    %221 = arith.mulf %217, %220 : vector<4x1xf32>
    %222 = arith.mulf %219, %219 : vector<4x1xf32>
    %223 = arith.subf %221, %222 : vector<4x1xf32>
    %cst_94 = arith.constant 0.000000e+00 : f32
    %224 = vector.broadcast %cst_94 : f32 to vector<4x1xf32>
    %225 = arith.maximumf %223, %224 : vector<4x1xf32>
    %226 = vector.broadcast %219 : vector<4x1xf32> to vector<4x256xf32>
    %227 = arith.subf %212, %226 : vector<4x256xf32>
    %cst_95 = arith.constant 9.99999974E-6 : f32
    %228 = vector.broadcast %cst_95 : f32 to vector<4x1xf32>
    %229 = arith.addf %225, %228 : vector<4x1xf32>
    %230 = math.rsqrt %229 : vector<4x1xf32>
    %231 = vector.broadcast %230 : vector<4x1xf32> to vector<4x256xf32>
    %232 = arith.mulf %227, %231 : vector<4x256xf32>
    %c0_96 = arith.constant 0 : index
    %c0_97 = arith.constant 0 : index
    %c0_98 = arith.constant 0 : index
    %233 = vector.load %arg7[%c0_96, %c0_97, %c0_98] : memref<1x8x1xf32, #tpu.memory_space<vmem>>, vector<1x8x1xf32>
    %234 = vector.shape_cast %233 : vector<1x8x1xf32> to vector<8x1xf32>
    %c0_99 = arith.constant 0 : index
    %c0_100 = arith.constant 0 : index
    %235 = vector.load %arg11[%c0_99, %c0_100] : memref<8x4xf32, #tpu.memory_space<vmem>>, vector<8x4xf32>
    %cst_101 = arith.constant dense<0.000000e+00> : vector<8x256xf32>
    %236 = tpu.matmul %235, %232, %cst_101 {dimension_numbers = #tpu.dot_dimension_numbers<[1], [0], [0], [1], [0, 0, 1, 1], [], []>} : vector<8x4xf32>, vector<4x256xf32>, vector<8x256xf32> -> vector<8x256xf32>
    %237 = vector.broadcast %234 : vector<8x1xf32> to vector<8x256xf32>
    %238 = arith.addf %236, %237 : vector<8x256xf32>
    %cst_102 = arith.constant 0.000000e+00 : f32
    %239 = vector.broadcast %cst_102 : f32 to vector<8x256xf32>
    %240 = arith.maximumf %238, %239 : vector<8x256xf32>
    %c0_103 = arith.constant 0 : index
    %c0_104 = arith.constant 0 : index
    %241 = vector.load %arg12[%c0_103, %c0_104] : memref<4x8xf32, #tpu.memory_space<vmem>>, vector<4x8xf32>
    %cst_105 = arith.constant dense<0.000000e+00> : vector<4x256xf32>
    %242 = tpu.matmul %241, %240, %cst_105 {dimension_numbers = #tpu.dot_dimension_numbers<[1], [0], [0], [1], [0, 0, 1, 1], [], []>} : vector<4x8xf32>, vector<8x256xf32>, vector<4x256xf32> -> vector<4x256xf32>
    %c0_106 = arith.constant 0 : index
    %c0_107 = arith.constant 0 : index
    %243 = vector.load %arg13[%c0_106, %c0_107] : memref<4x1xf32, #tpu.memory_space<vmem>>, vector<4x1xf32>
    %244 = vector.broadcast %243 : vector<4x1xf32> to vector<4x256xf32>
    %245 = arith.addf %242, %244 : vector<4x256xf32>
    %cst_108 = arith.constant 0.000000e+00 : f32
    %246 = vector.broadcast %cst_108 : f32 to vector<4x256xf32>
    %247 = arith.maximumf %245, %246 : vector<4x256xf32>
    %248 = arith.addf %247, %1 : vector<4x256xf32>
    %c0_109 = arith.constant 0 : index
    %c0_110 = arith.constant 0 : index
    %c0_111 = arith.constant 0 : index
    %249 = vector.load %arg14[%c0_109, %c0_110, %c0_111] : memref<1x4x256xf32, #tpu.memory_space<vmem>>, vector<1x4x256xf32>
    %250 = vector.shape_cast %249 : vector<1x4x256xf32> to vector<4x256xf32>
    %251 = vector.shape_cast %248 : vector<4x256xf32> to vector<1x4x256xf32>
    tpu.vector_store %arg14[%c0_109, %c0_110, %c0_111], %251 {strides = array<i32>} : memref<1x4x256xf32, #tpu.memory_space<vmem>>, vector<1x4x256xf32>,
    return
  }
  func.func @transform_0(%arg0: i32) -> (i32, i32, i32) {
    %c0_i32 = arith.constant 0 : i32
    %c0_i32_0 = arith.constant 0 : i32
    %c0_i32_1 = arith.constant 0 : i32
    return %arg0, %c0_i32, %c0_i32_0 : i32, i32, i32
  }
  func.func @transform_1(%arg0: i32) -> (i32, i32) {
    %c0_i32 = arith.constant 0 : i32
    %c0_i32_0 = arith.constant 0 : i32
    %c0_i32_1 = arith.constant 0 : i32
    return %c0_i32, %c0_i32_0 : i32, i32
  }
  func.func @transform_2(%arg0: i32) -> (i32, i32) {
    %c0_i32 = arith.constant 0 : i32
    %c0_i32_0 = arith.constant 0 : i32
    %c0_i32_1 = arith.constant 0 : i32
    return %c0_i32, %c0_i32_0 : i32, i32
  }
  func.func @transform_3(%arg0: i32) -> (i32, i32, i32) {
    %c0_i32 = arith.constant 0 : i32
    %c0_i32_0 = arith.constant 0 : i32
    %c0_i32_1 = arith.constant 0 : i32
    %c0_i32_2 = arith.constant 0 : i32
    return %c0_i32, %c0_i32_0, %c0_i32_1 : i32, i32, i32
  }
  func.func @transform_4(%arg0: i32) -> (i32, i32, i32) {
    %c0_i32 = arith.constant 0 : i32
    %c0_i32_0 = arith.constant 0 : i32
    %c0_i32_1 = arith.constant 0 : i32
    %c0_i32_2 = arith.constant 0 : i32
    return %c0_i32, %c0_i32_0, %c0_i32_1 : i32, i32, i32
  }
  func.func @transform_5(%arg0: i32) -> (i32, i32, i32) {
    %c0_i32 = arith.constant 0 : i32
    %c0_i32_0 = arith.constant 0 : i32
    %c0_i32_1 = arith.constant 0 : i32
    return %arg0, %c0_i32, %c0_i32_0 : i32, i32, i32
  }
  func.func @transform_6(%arg0: i32) -> (i32, i32, i32) {
    %c0_i32 = arith.constant 0 : i32
    %c0_i32_0 = arith.constant 0 : i32
    %c0_i32_1 = arith.constant 0 : i32
    return %arg0, %c0_i32, %c0_i32_0 : i32, i32, i32
  }
  func.func @transform_7(%arg0: i32) -> (i32, i32) {
    %c0_i32 = arith.constant 0 : i32
    %c0_i32_0 = arith.constant 0 : i32
    %c0_i32_1 = arith.constant 0 : i32
    return %c0_i32, %c0_i32_0 : i32, i32
  }
  func.func @transform_8(%arg0: i32) -> (i32, i32) {
    %c0_i32 = arith.constant 0 : i32
    %c0_i32_0 = arith.constant 0 : i32
    %c0_i32_1 = arith.constant 0 : i32
    return %c0_i32, %c0_i32_0 : i32, i32
  }
  func.func @transform_9(%arg0: i32) -> (i32, i32) {
    %c0_i32 = arith.constant 0 : i32
    %c0_i32_0 = arith.constant 0 : i32
    %c0_i32_1 = arith.constant 0 : i32
    return %c0_i32, %c0_i32_0 : i32, i32
  }
  func.func @transform_10(%arg0: i32) -> (i32, i32) {
    %c0_i32 = arith.constant 0 : i32
    %c0_i32_0 = arith.constant 0 : i32
    %c0_i32_1 = arith.constant 0 : i32
    return %c0_i32, %c0_i32_0 : i32, i32
  }
  func.func @transform_11(%arg0: i32) -> (i32, i32) {
    %c0_i32 = arith.constant 0 : i32
    %c0_i32_0 = arith.constant 0 : i32
    %c0_i32_1 = arith.constant 0 : i32
    return %c0_i32, %c0_i32_0 : i32, i32
  }
  func.func @transform_12(%arg0: i32) -> (i32, i32) {
    %c0_i32 = arith.constant 0 : i32
    %c0_i32_0 = arith.constant 0 : i32
    %c0_i32_1 = arith.constant 0 : i32
    return %c0_i32, %c0_i32_0 : i32, i32
  }
  func.func @transform_13(%arg0: i32) -> (i32, i32, i32) {
    %c0_i32 = arith.constant 0 : i32
    %c0_i32_0 = arith.constant 0 : i32
    %c0_i32_1 = arith.constant 0 : i32
    return %arg0, %c0_i32, %c0_i32_0 : i32, i32, i32
  }
}

</mosaic_0001>

<llo_original>
// kernel: tpu_custom_call.1
$region0: #{tpu_custom_call.1}
  #allocation0 [shape = 'u32[]', space=smem, size = 0x4, offset = 0x4, fixed_abs, tag = 'smem constant byte address 0x4 - core index']
  #allocation1 [shape = 'u32[72,128]{1,0:T(1,128)}', space=vmem, size = 0x9000, scoped, tag = 'internal scratch']
  %s0 = inlined_call_operand.vmem [shape: f32[2,4,256], index: 0, kind: input, shape index: {}]
  %s1 = inlined_call_operand.vmem [shape: s32[1,256], index: 1, kind: input, shape index: {}]
  %s2 = inlined_call_operand.vmem [shape: s32[1,256], index: 2, kind: input, shape index: {}]
  %s3 = inlined_call_operand.vmem [shape: f32[9,4,4], index: 3, kind: input, shape index: {}]
  %s4 = inlined_call_operand.vmem [shape: f32[9,4,4], index: 4, kind: input, shape index: {}]
  %s5 = inlined_call_operand.vmem [shape: f32[2,8,1], index: 5, kind: input, shape index: {}]
  %s6 = inlined_call_operand.vmem [shape: f32[2,8,1], index: 6, kind: input, shape index: {}]
  %s7 = inlined_call_operand.vmem [shape: f32[8,4], index: 7, kind: input, shape index: {}]
  %s8 = inlined_call_operand.vmem [shape: f32[4,8], index: 8, kind: input, shape index: {}]
  %s9 = inlined_call_operand.vmem [shape: f32[4,1], index: 9, kind: input, shape index: {}]
  %s10 = inlined_call_operand.vmem [shape: f32[8,4], index: 10, kind: input, shape index: {}]
  %s11 = inlined_call_operand.vmem [shape: f32[4,8], index: 11, kind: input, shape index: {}]
  %s12 = inlined_call_operand.vmem [shape: f32[4,1], index: 12, kind: input, shape index: {}]
  %s13 = inlined_call_operand.hbm [shape: f32[2,4,256], index: 13, kind: output, shape index: {}]
  %s14 = sld [smem:[#allocation0]]
  $region85: #{tpu_custom_call.1} parent=0
    _
  %s16 = ssub.s32 1, %s14
  %s17 = scalar_select 0, %s16, %s14
  $region1: #{tpu_custom_call.1} parent=0
    #allocation2 [shape = 'u8[8192]{0}', space=vmem, size = 0x2000, scoped, tag = 'output window, operand 0']
    #allocation3 [shape = 's32[2]{0}', space=sflag, size = 0x8, scoped, tag = 'scoped memory for tpu_custom_call.1']
    %18 = vsyncpa [#allocation3], 0
    %s19 = scalar_lea.sflag [#allocation3], 1
    %20 = vsyncpa %s19, 0
    loop: start=0, step=1, limit=4
    $region2: #{tpu_custom_call.1} parent=1 // loop_pre_header
      _
    $region3: #{tpu_custom_call.1} parent=1 // loop_header
      %s22 = sphi 0, %s26
      %p23 = scmp.ge.s32.totalorder %s22, 4
      %s32 = sphi 0, %s34
      %s35 = sphi 0, %s32
      %s36 = sphi 0, %s35
      %s52 = sphi 0, %s36
      %s56 = sphi 0, %s56
      %s58 = sphi 0, %s56
      %s59 = sphi 0, %s58
      %s73 = sphi 0, %s59
      %s77 = sphi 0, %s77
      %s79 = sphi 0, %s77
      %s80 = sphi 0, %s79
      %s94 = sphi 0, %s80
      %s98 = sphi 0, %s98
      %s100 = sphi 0, %s98
      %s101 = sphi 0, %s100
      %s115 = sphi 0, %s101
      %s119 = sphi 0, %s119
      %s121 = sphi 0, %s119
      %s122 = sphi 0, %s121
      %s136 = sphi 0, %s122
      %s142 = sphi 0, %s144
      %s145 = sphi 0, %s142
      %s146 = sphi 0, %s145
      %s162 = sphi 0, %s146
      %s168 = sphi 0, %s170
      %s171 = sphi 0, %s168
      %s172 = sphi 0, %s171
      %s188 = sphi 0, %s172
      %s192 = sphi 0, %s192
      %s194 = sphi 0, %s192
      %s195 = sphi 0, %s194
      %s209 = sphi 0, %s195
      %s213 = sphi 0, %s213
      %s215 = sphi 0, %s213
      %s216 = sphi 0, %s215
      %s230 = sphi 0, %s216
      %s234 = sphi 0, %s234
      %s236 = sphi 0, %s234
      %s237 = sphi 0, %s236
      %s251 = sphi 0, %s237
      %s255 = sphi 0, %s255
      %s257 = sphi 0, %s255
      %s258 = sphi 0, %s257
      %s272 = sphi 0, %s258
      %s276 = sphi 0, %s276
      %s278 = sphi 0, %s276
      %s279 = sphi 0, %s278
      %s293 = sphi 0, %s279
      %s297 = sphi 0, %s297
      %s299 = sphi 0, %s297
      %s300 = sphi 0, %s299
      %s314 = sphi 0, %s300
      %s320 = sphi 0, %s322
      %s323 = sphi 0, %s320
      %s324 = sphi 0, %s323
      %s340 = sphi 0, %s324
    $region4: #{tpu_custom_call.1} parent=1 // loop_header_branch
      %25 = sbr.rel (%p23) target = $region8
    $region5: #{tpu_custom_call.1} parent=1 // loop_body
      %s27 = ssub.s32 %s22, 1
      %s28 = ssub.s32 %s22, 2
      %s29 = sadd.s32 %s22, 1
      %s30 = ssub.s32 %s22, %s29
      %p31 = scmp.eq.s32.totalorder %s30, 0
      %s33 = sadd.s32 %s32, 1
      %s34 = scalar_select %p31, %s32, %s33
      %p37 = pneg %p31
      %p38 = scmp.eq.s32.totalorder %s22, 1
      %p39 = por %p37, %p38
      %p40 = scmp.ne.s32.totalorder %s32, %s35
      %p41 = scmp.eq.s32.totalorder %s22, 0
      %p42 = por %p40, %p41
      %p43 = scmp.ne.s32.totalorder %s32, %s35
      %p44 = scmp.eq.s32.totalorder %s27, 1
      %p45 = por %p43, %p44
      %p46 = scmp.ne.s32.totalorder %s35, %s36
      %p47 = scmp.eq.s32.totalorder %s27, 0
      %p48 = por %p46, %p47
      %p49 = scmp.ne.s32.totalorder %s35, %s36
      %p50 = scmp.eq.s32.totalorder %s28, 1
      %p51 = por %p49, %p50
      %p53 = scmp.ne.s32.totalorder %s36, %s52
      %p54 = scmp.eq.s32.totalorder %s28, 0
      %p55 = por %p53, %p54
      %s57 = sadd.s32 %s56, 1
      %p60 = scmp.eq.s32.totalorder %s22, 1
      %p61 = scmp.ne.s32.totalorder %s56, %s58
      %p62 = scmp.eq.s32.totalorder %s22, 0
      %p63 = por %p61, %p62
      %p64 = scmp.ne.s32.totalorder %s56, %s58
      %p65 = scmp.eq.s32.totalorder %s27, 1
      %p66 = por %p64, %p65
      %p67 = scmp.ne.s32.totalorder %s58, %s59
      %p68 = scmp.eq.s32.totalorder %s27, 0
      %p69 = por %p67, %p68
      %p70 = scmp.ne.s32.totalorder %s58, %s59
      %p71 = scmp.eq.s32.totalorder %s28, 1
      %p72 = por %p70, %p71
      %p74 = scmp.ne.s32.totalorder %s59, %s73
      %p75 = scmp.eq.s32.totalorder %s28, 0
      %p76 = por %p74, %p75
      %s78 = sadd.s32 %s77, 1
      %p81 = scmp.eq.s32.totalorder %s22, 1
      %p82 = scmp.ne.s32.totalorder %s77, %s79
      %p83 = scmp.eq.s32.totalorder %s22, 0
      %p84 = por %p82, %p83
      %p85 = scmp.ne.s32.totalorder %s77, %s79
      %p86 = scmp.eq.s32.totalorder %s27, 1
      %p87 = por %p85, %p86
      %p88 = scmp.ne.s32.totalorder %s79, %s80
      %p89 = scmp.eq.s32.totalorder %s27, 0
      %p90 = por %p88, %p89
      %p91 = scmp.ne.s32.totalorder %s79, %s80
      %p92 = scmp.eq.s32.totalorder %s28, 1
      %p93 = por %p91, %p92
      %p95 = scmp.ne.s32.totalorder %s80, %s94
      %p96 = scmp.eq.s32.totalorder %s28, 0
      %p97 = por %p95, %p96
      %s99 = sadd.s32 %s98, 1
      %p102 = scmp.eq.s32.totalorder %s22, 1
      %p103 = scmp.ne.s32.totalorder %s98, %s100
      %p104 = scmp.eq.s32.totalorder %s22, 0
      %p105 = por %p103, %p104
      %p106 = scmp.ne.s32.totalorder %s98, %s100
      %p107 = scmp.eq.s32.totalorder %s27, 1
      %p108 = por %p106, %p107
      %p109 = scmp.ne.s32.totalorder %s100, %s101
      %p110 = scmp.eq.s32.totalorder %s27, 0
      %p111 = por %p109, %p110
      %p112 = scmp.ne.s32.totalorder %s100, %s101
      %p113 = scmp.eq.s32.totalorder %s28, 1
      %p114 = por %p112, %p113
      %p116 = scmp.ne.s32.totalorder %s101, %s115
      %p117 = scmp.eq.s32.totalorder %s28, 0
      %p118 = por %p116, %p117
      %s120 = sadd.s32 %s119, 1
      %p123 = scmp.eq.s32.totalorder %s22, 1
      %p124 = scmp.ne.s32.totalorder %s119, %s121
      %p125 = scmp.eq.s32.totalorder %s22, 0
      %p126 = por %p124, %p125
      %p127 = scmp.ne.s32.totalorder %s119, %s121
      %p128 = scmp.eq.s32.totalorder %s27, 1
      %p129 = por %p127, %p128
      %p130 = scmp.ne.s32.totalorder %s121, %s122
      %p131 = scmp.eq.s32.totalorder %s27, 0
      %p132 = por %p130, %p131
      %p133 = scmp.ne.s32.totalorder %s121, %s122
      %p134 = scmp.eq.s32.totalorder %s28, 1
      %p135 = por %p133, %p134
      %p137 = scmp.ne.s32.totalorder %s122, %s136
      %p138 = scmp.eq.s32.totalorder %s28, 0
      %p139 = por %p137, %p138
      %s140 = ssub.s32 %s22, %s29
      %p141 = scmp.eq.s32.totalorder %s140, 0
      %s143 = sadd.s32 %s142, 1
      %s144 = scalar_select %p141, %s142, %s143
      %p147 = pneg %p141
      %p148 = scmp.eq.s32.totalorder %s22, 1
      %p149 = por %p147, %p148
      %p150 = scmp.ne.s32.totalorder %s142, %s145
      %p151 = scmp.eq.s32.totalorder %s22, 0
      %p152 = por %p150, %p151
      %p153 = scmp.ne.s32.totalorder %s142, %s145
      %p154 = scmp.eq.s32.totalorder %s27, 1
      %p155 = por %p153, %p154
      %p156 = scmp.ne.s32.totalorder %s145, %s146
      %p157 = scmp.eq.s32.totalorder %s27, 0
      %p158 = por %p156, %p157
      %p159 = scmp.ne.s32.totalorder %s145, %s146
      %p160 = scmp.eq.s32.totalorder %s28, 1
      %p161 = por %p159, %p160
      %p163 = scmp.ne.s32.totalorder %s146, %s162
      %p164 = scmp.eq.s32.totalorder %s28, 0
      %p165 = por %p163, %p164
      %s166 = ssub.s32 %s22, %s29
      %p167 = scmp.eq.s32.totalorder %s166, 0
      %s169 = sadd.s32 %s168, 1
      %s170 = scalar_select %p167, %s168, %s169
      %p173 = pneg %p167
      %p174 = scmp.eq.s32.totalorder %s22, 1
      %p175 = por %p173, %p174
      %p176 = scmp.ne.s32.totalorder %s168, %s171
      %p177 = scmp.eq.s32.totalorder %s22, 0
      %p178 = por %p176, %p177
      %p179 = scmp.ne.s32.totalorder %s168, %s171
      %p180 = scmp.eq.s32.totalorder %s27, 1
      %p181 = por %p179, %p180
      %p182 = scmp.ne.s32.totalorder %s171, %s172
      %p183 = scmp.eq.s32.totalorder %s27, 0
      %p184 = por %p182, %p183
      %p185 = scmp.ne.s32.totalorder %s171, %s172
      %p186 = scmp.eq.s32.totalorder %s28, 1
      %p187 = por %p185, %p186
      %p189 = scmp.ne.s32.totalorder %s172, %s188
      %p190 = scmp.eq.s32.totalorder %s28, 0
      %p191 = por %p189, %p190
      %s193 = sadd.s32 %s192, 1
      %p196 = scmp.eq.s32.totalorder %s22, 1
      %p197 = scmp.ne.s32.totalorder %s192, %s194
      %p198 = scmp.eq.s32.totalorder %s22, 0
      %p199 = por %p197, %p198
      %p200 = scmp.ne.s32.totalorder %s192, %s194
      %p201 = scmp.eq.s32.totalorder %s27, 1
      %p202 = por %p200, %p201
      %p203 = scmp.ne.s32.totalorder %s194, %s195
      %p204 = scmp.eq.s32.totalorder %s27, 0
      %p205 = por %p203, %p204
      %p206 = scmp.ne.s32.totalorder %s194, %s195
      %p207 = scmp.eq.s32.totalorder %s28, 1
      %p208 = por %p206, %p207
      %p210 = scmp.ne.s32.totalorder %s195, %s209
      %p211 = scmp.eq.s32.totalorder %s28, 0
      %p212 = por %p210, %p211
      %s214 = sadd.s32 %s213, 1
      %p217 = scmp.eq.s32.totalorder %s22, 1
      %p218 = scmp.ne.s32.totalorder %s213, %s215
      %p219 = scmp.eq.s32.totalorder %s22, 0
      %p220 = por %p218, %p219
      %p221 = scmp.ne.s32.totalorder %s213, %s215
      %p222 = scmp.eq.s32.totalorder %s27, 1
      %p223 = por %p221, %p222
      %p224 = scmp.ne.s32.totalorder %s215, %s216
      %p225 = scmp.eq.s32.totalorder %s27, 0
      %p226 = por %p224, %p225
      %p227 = scmp.ne.s32.totalorder %s215, %s216
      %p228 = scmp.eq.s32.totalorder %s28, 1
      %p229 = por %p227, %p228
      %p231 = scmp.ne.s32.totalorder %s216, %s230
      %p232 = scmp.eq.s32.totalorder %s28, 0
      %p233 = por %p231, %p232
      %s235 = sadd.s32 %s234, 1
      %p238 = scmp.eq.s32.totalorder %s22, 1
      %p239 = scmp.ne.s32.totalorder %s234, %s236
      %p240 = scmp.eq.s32.totalorder %s22, 0
      %p241 = por %p239, %p240
      %p242 = scmp.ne.s32.totalorder %s234, %s236
      %p243 = scmp.eq.s32.totalorder %s27, 1
      %p244 = por %p242, %p243
      %p245 = scmp.ne.s32.totalorder %s236, %s237
      %p246 = scmp.eq.s32.totalorder %s27, 0
      %p247 = por %p245, %p246
      %p248 = scmp.ne.s32.totalorder %s236, %s237
      %p249 = scmp.eq.s32.totalorder %s28, 1
      %p250 = por %p248, %p249
      %p252 = scmp.ne.s32.totalorder %s237, %s251
      %p253 = scmp.eq.s32.totalorder %s28, 0
      %p254 = por %p252, %p253
      %s256 = sadd.s32 %s255, 1
      %p259 = scmp.eq.s32.totalorder %s22, 1
      %p260 = scmp.ne.s32.totalorder %s255, %s257
      %p261 = scmp.eq.s32.totalorder %s22, 0
      %p262 = por %p260, %p261
      %p263 = scmp.ne.s32.totalorder %s255, %s257
      %p264 = scmp.eq.s32.totalorder %s27, 1
      %p265 = por %p263, %p264
      %p266 = scmp.ne.s32.totalorder %s257, %s258
      %p267 = scmp.eq.s32.totalorder %s27, 0
      %p268 = por %p266, %p267
      %p269 = scmp.ne.s32.totalorder %s257, %s258
      %p270 = scmp.eq.s32.totalorder %s28, 1
      %p271 = por %p269, %p270
      %p273 = scmp.ne.s32.totalorder %s258, %s272
      %p274 = scmp.eq.s32.totalorder %s28, 0
      %p275 = por %p273, %p274
      %s277 = sadd.s32 %s276, 1
      %p280 = scmp.eq.s32.totalorder %s22, 1
      %p281 = scmp.ne.s32.totalorder %s276, %s278
      %p282 = scmp.eq.s32.totalorder %s22, 0
      %p283 = por %p281, %p282
      %p284 = scmp.ne.s32.totalorder %s276, %s278
      %p285 = scmp.eq.s32.totalorder %s27, 1
      %p286 = por %p284, %p285
      %p287 = scmp.ne.s32.totalorder %s278, %s279
      %p288 = scmp.eq.s32.totalorder %s27, 0
      %p289 = por %p287, %p288
      %p290 = scmp.ne.s32.totalorder %s278, %s279
      %p291 = scmp.eq.s32.totalorder %s28, 1
      %p292 = por %p290, %p291
      %p294 = scmp.ne.s32.totalorder %s279, %s293
      %p295 = scmp.eq.s32.totalorder %s28, 0
      %p296 = por %p294, %p295
      %s298 = sadd.s32 %s297, 1
      %p301 = scmp.eq.s32.totalorder %s22, 1
      %p302 = scmp.ne.s32.totalorder %s297, %s299
      %p303 = scmp.eq.s32.totalorder %s22, 0
      %p304 = por %p302, %p303
      %p305 = scmp.ne.s32.totalorder %s297, %s299
      %p306 = scmp.eq.s32.totalorder %s27, 1
      %p307 = por %p305, %p306
      %p308 = scmp.ne.s32.totalorder %s299, %s300
      %p309 = scmp.eq.s32.totalorder %s27, 0
      %p310 = por %p308, %p309
      %p311 = scmp.ne.s32.totalorder %s299, %s300
      %p312 = scmp.eq.s32.totalorder %s28, 1
      %p313 = por %p311, %p312
      %p315 = scmp.ne.s32.totalorder %s300, %s314
      %p316 = scmp.eq.s32.totalorder %s28, 0
      %p317 = por %p315, %p316
      %s318 = ssub.s32 %s22, %s29
      %p319 = scmp.eq.s32.totalorder %s318, 0
      %s321 = sadd.s32 %s320, 1
      %s322 = scalar_select %p319, %s320, %s321
      %p325 = pneg %p319
      %p326 = scmp.eq.s32.totalorder %s22, 1
      %p327 = por %p325, %p326
      %p328 = scmp.ne.s32.totalorder %s320, %s323
      %p329 = scmp.eq.s32.totalorder %s22, 0
      %p330 = por %p328, %p329
      %p331 = scmp.ne.s32.totalorder %s320, %s323
      %p332 = scmp.eq.s32.totalorder %s27, 1
      %p333 = por %p331, %p332
      %p334 = scmp.ne.s32.totalorder %s323, %s324
      %p335 = scmp.eq.s32.totalorder %s27, 0
      %p336 = por %p334, %p335
      %p337 = scmp.ne.s32.totalorder %s323, %s324
      %p338 = scmp.eq.s32.totalorder %s28, 1
      %p339 = por %p337, %p338
      %p341 = scmp.ne.s32.totalorder %s324, %s340
      %p342 = scmp.eq.s32.totalorder %s28, 0
      %p343 = por %p341, %p342
      %p344 = scmp.le.s32.totalorder 1, %s22
      %p345 = scmp.lt.s32.totalorder %s22, 3
      %p346 = pnand %p344, %p345
      %p347 = pneg %p346
      // Predicated region
      $region9: #{tpu_custom_call.1} parent=5 // pred_check
        _
      $region10: #{tpu_custom_call.1} parent=5 // pred_check_branch
        %349 = sbr.rel (%p346) target = $region12
      $region11: #{tpu_custom_call.1} parent=5 // pred_region
        %s350 = ssub.s32 %s22, 1
        // Predicated region
        $region13: #{tpu_custom_call.1} parent=11 // pred_check
          %p351 = pneg %p69
        $region14: #{tpu_custom_call.1} parent=11 // pred_check_branch
          %353 = sbr.rel (%p351) target = $region16
        $region15: #{tpu_custom_call.1} parent=11 // pred_region
          _
        $region16: #{tpu_custom_call.1} parent=11 // pred_fallthru
          _
        // Predicated region
        $region17: #{tpu_custom_call.1} parent=11 // pred_check
          %p354 = pneg %p90
        $region18: #{tpu_custom_call.1} parent=11 // pred_check_branch
          %356 = sbr.rel (%p354) target = $region20
        $region19: #{tpu_custom_call.1} parent=11 // pred_region
          _
        $region20: #{tpu_custom_call.1} parent=11 // pred_fallthru
          _
        // Predicated region
        $region21: #{tpu_custom_call.1} parent=11 // pred_check
          %p357 = pneg %p111
        $region22: #{tpu_custom_call.1} parent=11 // pred_check_branch
          %359 = sbr.rel (%p357) target = $region24
        $region23: #{tpu_custom_call.1} parent=11 // pred_region
          _
        $region24: #{tpu_custom_call.1} parent=11 // pred_fallthru
          _
        // Predicated region
        $region25: #{tpu_custom_call.1} parent=11 // pred_check
          %p360 = pneg %p132
        $region26: #{tpu_custom_call.1} parent=11 // pred_check_branch
          %362 = sbr.rel (%p360) target = $region28
        $region27: #{tpu_custom_call.1} parent=11 // pred_region
          _
        $region28: #{tpu_custom_call.1} parent=11 // pred_fallthru
          _
        // Predicated region
        $region29: #{tpu_custom_call.1} parent=11 // pred_check
          %p363 = pneg %p205
        $region30: #{tpu_custom_call.1} parent=11 // pred_check_branch
          %365 = sbr.rel (%p363) target = $region32
        $region31: #{tpu_custom_call.1} parent=11 // pred_region
          _
        $region32: #{tpu_custom_call.1} parent=11 // pred_fallthru
          _
        // Predicated region
        $region33: #{tpu_custom_call.1} parent=11 // pred_check
          %p366 = pneg %p226
        $region34: #{tpu_custom_call.1} parent=11 // pred_check_branch
          %368 = sbr.rel (%p366) target = $region36
        $region35: #{tpu_custom_call.1} parent=11 // pred_region
          _
        $region36: #{tpu_custom_call.1} parent=11 // pred_fallthru
          _
        // Predicated region
        $region37: #{tpu_custom_call.1} parent=11 // pred_check
          %p369 = pneg %p247
        $region38: #{tpu_custom_call.1} parent=11 // pred_check_branch
          %371 = sbr.rel (%p369) target = $region40
        $region39: #{tpu_custom_call.1} parent=11 // pred_region
          _
        $region40: #{tpu_custom_call.1} parent=11 // pred_fallthru
          _
        // Predicated region
        $region41: #{tpu_custom_call.1} parent=11 // pred_check
          %p372 = pneg %p268
        $region42: #{tpu_custom_call.1} parent=11 // pred_check_branch
          %374 = sbr.rel (%p372) target = $region44
        $region43: #{tpu_custom_call.1} parent=11 // pred_region
          _
        $region44: #{tpu_custom_call.1} parent=11 // pred_fallthru
          _
        // Predicated region
        $region45: #{tpu_custom_call.1} parent=11 // pred_check
          %p375 = pneg %p289
        $region46: #{tpu_custom_call.1} parent=11 // pred_check_branch
          %377 = sbr.rel (%p375) target = $region48
        $region47: #{tpu_custom_call.1} parent=11 // pred_region
          _
        $region48: #{tpu_custom_call.1} parent=11 // pred_fallthru
          _
        // Predicated region
        $region49: #{tpu_custom_call.1} parent=11 // pred_check
          %p378 = pneg %p310
        $region50: #{tpu_custom_call.1} parent=11 // pred_check_branch
          %380 = sbr.rel (%p378) target = $region52
        $region51: #{tpu_custom_call.1} parent=11 // pred_region
          _
        $region52: #{tpu_custom_call.1} parent=11 // pred_fallthru
          _
      $region12: #{tpu_custom_call.1} parent=5 // pred_fallthru
        _
      %p381 = scmp.lt.s32.totalorder %s22, 2
      // Predicated region
      $region53: #{tpu_custom_call.1} parent=5 // pred_check
        %p382 = pneg %p381
      $region54: #{tpu_custom_call.1} parent=5 // pred_check_branch
        %384 = sbr.rel (%p382) target = $region56
      $region55: #{tpu_custom_call.1} parent=5 // pred_region
        // Predicated region
        $region57: #{tpu_custom_call.1} parent=55 // pred_check
          %p385 = pneg %p42
        $region58: #{tpu_custom_call.1} parent=55 // pred_check_branch
          %387 = sbr.rel (%p385) target = $region60
        $region59: #{tpu_custom_call.1} parent=55 // pred_region
          %p388 = scmp.lt.s32.totalorder %s22, 1
          %s389 = scalar_select %p388, %s22, 1
          %s390 = smul.addr %s389, 2
          %s391 = smul.addr %s390, 4
          %s392 = scalar_lea.vmem %s0, %s391
        $region60: #{tpu_custom_call.1} parent=55 // pred_fallthru
          _
        // Predicated region
        $region61: #{tpu_custom_call.1} parent=55 // pred_check
          %p393 = pneg %p152
        $region62: #{tpu_custom_call.1} parent=55 // pred_check_branch
          %395 = sbr.rel (%p393) target = $region64
        $region63: #{tpu_custom_call.1} parent=55 // pred_region
          %p396 = scmp.lt.s32.totalorder %s22, 1
          %s397 = scalar_select %p396, %s22, 1
          %s398 = smul.addr %s397, 8
          %s399 = scalar_lea.vmem %s5, %s398
        $region64: #{tpu_custom_call.1} parent=55 // pred_fallthru
          _
        // Predicated region
        $region65: #{tpu_custom_call.1} parent=55 // pred_check
          %p400 = pneg %p178
        $region66: #{tpu_custom_call.1} parent=55 // pred_check_branch
          %402 = sbr.rel (%p400) target = $region68
        $region67: #{tpu_custom_call.1} parent=55 // pred_region
          %p403 = scmp.lt.s32.totalorder %s22, 1
          %s404 = scalar_select %p403, %s22, 1
          %s405 = smul.addr %s404, 8
          %s406 = scalar_lea.vmem %s6, %s405
        $region68: #{tpu_custom_call.1} parent=55 // pred_fallthru
          _
      $region56: #{tpu_custom_call.1} parent=5 // pred_fallthru
        _
      %p407 = scmp.le.s32.totalorder 1, %s22
      %p408 = scmp.lt.s32.totalorder %s22, 3
      %p409 = pnand %p407, %p408
      %p410 = pneg %p409
      // Predicated region
      $region69: #{tpu_custom_call.1} parent=5 // pred_check
        _
      $region70: #{tpu_custom_call.1} parent=5 // pred_check_branch
        %412 = sbr.rel (%p409) target = $region72
      $region71: #{tpu_custom_call.1} parent=5 // pred_region
        %s413 = ssub.s32 %s22, 1
        %p414 = scmp.lt.s32.totalorder %s27, 1
        %s415 = scalar_select %p414, %s27, 1
        %s416 = smul.addr %s415, 2
        %s417 = smul.addr %s416, 4
        %s418 = scalar_lea.vmem %s0, %s417
        %p419 = pneg %p48
        %p420 = pneg %p45
        %p421 = pneg %p69
        %p422 = pneg %p66
        %p423 = pneg %p90
        %p424 = pneg %p87
        %p425 = pneg %p111
        %p426 = pneg %p108
        %p427 = pneg %p132
        %p428 = pneg %p129
        %p429 = scmp.lt.s32.totalorder %s27, 1
        %s430 = scalar_select %p429, %s27, 1
        %s431 = smul.addr %s430, 8
        %s432 = scalar_lea.vmem %s5, %s431
        %p433 = pneg %p158
        %p434 = pneg %p155
        %p435 = scmp.lt.s32.totalorder %s27, 1
        %s436 = scalar_select %p435, %s27, 1
        %s437 = smul.addr %s436, 8
        %s438 = scalar_lea.vmem %s6, %s437
        %p439 = pneg %p184
        %p440 = pneg %p181
        %p441 = pneg %p205
        %p442 = pneg %p202
        %p443 = pneg %p226
        %p444 = pneg %p223
        %p445 = pneg %p247
        %p446 = pneg %p244
        %p447 = pneg %p268
        %p448 = pneg %p265
        %p449 = pneg %p289
        %p450 = pneg %p286
        %p451 = pneg %p310
        %p452 = pneg %p307
        %p453 = pneg %p336
        %p454 = pneg %p333
        %s455 = sand.u32 %s323, 1
        %s456 = scalar_lea.sflag [#allocation3], %s455
        %s457 = sand.u32 %s323, 1
        %s458 = smul.addr %s457, 8
        %s459 = scalar_lea.vmem [#allocation2], %s458
        %p460 = scmp.lt.s32.totalorder %s27, 1
        %s461 = scalar_select %p460, %s27, 1
        %s462 = smul.addr %s461, 2
        %s463 = smul.addr %s462, 4
        %s464 = scalar_lea.vmem %s0, %s463
        %p465 = scmp.lt.s32.totalorder %s27, 1
        %s466 = scalar_select %p465, %s27, 1
        %s467 = smul.addr %s466, 8
        %s468 = scalar_lea.vmem %s5, %s467
        %p469 = scmp.lt.s32.totalorder %s27, 1
        %s470 = scalar_select %p469, %s27, 1
        %s471 = smul.addr %s470, 8
        %s472 = scalar_lea.vmem %s6, %s471
        %v473 = vld [vmem:[%s464] sm:$0xff]
        %v474 = vld [vmem:[%s1] sm:$0x3]
        %v475 = vld [vmem:[%s2] sm:$0x3]
        %vm476 = vcmp.eq.s32.totalorder %v474, 0
        %vm477 = vcmp.eq.s32.totalorder %v474, 15
        %vm478 = vcmp.eq.s32.totalorder %v475, 0
        %vm479 = vcmp.eq.s32.totalorder %v475, 15
        %481 = vst [vmem:[#allocation1] ss:$2 sm:$0xff] %v473
        %v482 = vld.sshfl [vmem:[#allocation1 + $0x8] sm:$0xff pattern:$0x75316420]
        %483 = vrot.lane.b32.xlu0 %v482, 16
        %v484 = vpop.permute.xlu0 %483
        %486 = vst [vmem:[#allocation1] ss:$2 sm:$0xff] %v473
        %v487 = vld.sshfl [vmem:[#allocation1] sm:$0xff pattern:$0x75316420]
        %v488 = vld.sshfl [vmem:[#allocation1 + $0x8] sm:$0xff pattern:$0x75316420]
        %489 = vrot.lane.b32.xlu0 %v487, 16
        %v490 = vpop.permute.xlu0 %489
        %491 = vrot.lane.b32.xlu0 %v488, 16
        %v492 = vpop.permute.xlu0 %491
        %vm493 = vcmask 130048
        %v494 = vsel %vm493, %v490, %v492
        %v497 = vsel %vm493, %v484, %v490
        %498 = vst [vmem:[#allocation1] ss:$2 sm:$0xff] %v473
        %v499 = vld.sshfl [vmem:[#allocation1] sm:$0xff pattern:$0x75316420]
        %v500 = vld.sshfl [vmem:[#allocation1 + $0x8] sm:$0xff pattern:$0x75316420]
        %501 = vrot.lane.b32.xlu0 %v499, 112
        %v502 = vpop.permute.xlu0 %501
        %503 = vrot.lane.b32.xlu0 %v500, 112
        %v504 = vpop.permute.xlu0 %503
        %vm505 = vcmask 916480
        %v506 = vsel %vm505, %v502, %v504
        %509 = vst [vmem:[#allocation1] ss:$2 sm:$0xff] %v473
        %v510 = vld.sshfl [vmem:[#allocation1] sm:$0xff pattern:$0x75316420]
        %511 = vrot.lane.b32.xlu0 %v510, 112
        %v512 = vpop.permute.xlu0 %511
        %v514 = vsel %vm505, %v504, %v512
        %v515 = vsel %vm478, 1, 0
        %v516 = vperm.slane %v515, 0
        %v517 = vperm.slane %v515, 1
        %vm518 = vcmp.eq.s32.totalorder %v516, 1
        %vm519 = vcmp.eq.s32.totalorder %v517, 1
        %v520 = vsel %vm518, %v506, %v497
        %v521 = vsel %vm519, %v514, %v494
        %v522 = vsel %vm479, 1, 0
        %v523 = vperm.slane %v522, 0
        %v524 = vperm.slane %v522, 1
        %vm525 = vcmp.eq.s32.totalorder %v523, 1
        %vm526 = vcmp.eq.s32.totalorder %v524, 1
        %v527 = vsel %vm525, %v497, %v506
        %v528 = vsel %vm526, %v494, %v514
        %530 = vrot.lane.b32.xlu0 %v521, 1
        %v531 = vpop.permute.xlu0 %530
        %534 = vrot.lane.b32.xlu0 %v520, 1
        %v535 = vpop.permute.xlu0 %534
        %vm536 = vcmask 7168
        %v537 = vsel %vm536, %v535, %v531
        %v540 = vsel %vm536, %v531, %v535
        %541 = vrot.lane.b32.xlu0 %v520, 127
        %v542 = vpop.permute.xlu0 %541
        %543 = vrot.lane.b32.xlu0 %v521, 127
        %v544 = vpop.permute.xlu0 %543
        %vm545 = vcmask 1039360
        %v546 = vsel %vm545, %v542, %v544
        %v550 = vsel %vm545, %v544, %v542
        %v551 = vsel %vm476, 1, 0
        %v552 = vperm.slane %v551, 0
        %v553 = vperm.slane %v551, 1
        %vm554 = vcmp.eq.s32.totalorder %v552, 1
        %vm555 = vcmp.eq.s32.totalorder %v553, 1
        %v556 = vsel %vm554, %v546, %v540
        %v557 = vsel %vm555, %v550, %v537
        %v558 = vsel %vm477, 1, 0
        %v559 = vperm.slane %v558, 0
        %v560 = vperm.slane %v558, 1
        %vm561 = vcmp.eq.s32.totalorder %v559, 1
        %vm562 = vcmp.eq.s32.totalorder %v560, 1
        %v563 = vsel %vm561, %v540, %v546
        %v564 = vsel %vm562, %v537, %v550
        %565 = vst [vmem:[#allocation1] ss:$2 sm:$0xff] %v473
        %v566 = vld.sshfl [vmem:[#allocation1 + $0x8] sm:$0xff pattern:$0x75316420]
        %567 = vrot.lane.b32.xlu0 %v566, 1
        %v568 = vpop.permute.xlu0 %567
        %570 = vst [vmem:[#allocation1] ss:$2 sm:$0xff] %v473
        %v571 = vld.sshfl [vmem:[#allocation1] sm:$0xff pattern:$0x75316420]
        %v572 = vld.sshfl [vmem:[#allocation1 + $0x8] sm:$0xff pattern:$0x75316420]
        %573 = vrot.lane.b32.xlu0 %v571, 1
        %v574 = vpop.permute.xlu0 %573
        %575 = vrot.lane.b32.xlu0 %v572, 1
        %v576 = vpop.permute.xlu0 %575
        %v577 = vsel %vm536, %v574, %v576
        %v580 = vsel %vm536, %v568, %v574
        %581 = vst [vmem:[#allocation1] ss:$2 sm:$0xff] %v473
        %v582 = vld.sshfl [vmem:[#allocation1] sm:$0xff pattern:$0x75316420]
        %v583 = vld.sshfl [vmem:[#allocation1 + $0x8] sm:$0xff pattern:$0x75316420]
        %584 = vrot.lane.b32.xlu0 %v582, 127
        %v585 = vpop.permute.xlu0 %584
        %586 = vrot.lane.b32.xlu0 %v583, 127
        %v587 = vpop.permute.xlu0 %586
        %v588 = vsel %vm545, %v585, %v587
        %591 = vst [vmem:[#allocation1] ss:$2 sm:$0xff] %v473
        %v592 = vld.sshfl [vmem:[#allocation1] sm:$0xff pattern:$0x75316420]
        %593 = vrot.lane.b32.xlu0 %v592, 127
        %v594 = vpop.permute.xlu0 %593
        %v596 = vsel %vm545, %v587, %v594
        %v597 = vsel %vm554, %v588, %v580
        %v598 = vsel %vm555, %v596, %v577
        %v599 = vsel %vm561, %v580, %v588
        %v600 = vsel %vm562, %v577, %v596
        %602 = vrot.lane.b32.xlu0 %v528, 1
        %v603 = vpop.permute.xlu0 %602
        %606 = vrot.lane.b32.xlu0 %v527, 1
        %v607 = vpop.permute.xlu0 %606
        %v608 = vsel %vm536, %v607, %v603
        %v611 = vsel %vm536, %v603, %v607
        %612 = vrot.lane.b32.xlu0 %v527, 127
        %v613 = vpop.permute.xlu0 %612
        %614 = vrot.lane.b32.xlu0 %v528, 127
        %v615 = vpop.permute.xlu0 %614
        %v616 = vsel %vm545, %v613, %v615
        %v620 = vsel %vm545, %v615, %v613
        %v621 = vsel %vm554, %v616, %v611
        %v622 = vsel %vm555, %v620, %v608
        %v623 = vsel %vm561, %v611, %v616
        %v624 = vsel %vm562, %v608, %v620
        %v625 = vld [vmem:[%s3] sm:$0xf]
        %s626 = scalar_lea.vmem %s3, 4
        %v627 = vld [vmem:[%s626] sm:$0xf]
        %vm628 = vcmask 31744
        %v630 = vsel %vm628, %v627, 0
        %vm632 = vcmask 1043456
        %v633 = vsel %vm632, %v520, 0
        %v635 = vsel %vm632, %v521, 0
        %637 = vmatpush.msra.mxu0 0.0
        %638 = vmatpush.msra.mxu0 0.0
        %639 = vmatpush.msra.mxu0 0.0
        %640 = vmatpush.msra.mxu0 0.0
        %641 = vmatpush.msra.mxu0 0.0
        %642 = vmatpush.msra.mxu0 0.0
        %643 = vmatpush.msra.mxu0 0.0
        %644 = vmatpush.msra.mxu0 0.0
        %645 = vmatpush.msra.mxu0 0.0
        %646 = vmatpush.msra.mxu0 0.0
        %647 = vmatpush.msra.mxu0 0.0
        %648 = vmatpush.msra.mxu0 0.0
        %649 = vmatpush.msra.mxu0 0.0
        %650 = vmatpush.msra.mxu0 0.0
        %651 = vmatpush.msra.mxu0 0.0
        %652 = vmatpush.msra.mxu0 %v633
        %653 = vmatmul.f32.gmra.mxu0 %v630
        %v654 = vpop.f32.mrf.mxu0
        %v655 = vadd.f32 0.0, %v654
        %656 = vdwg.mxu0
        %657 = vmatpush.msra.mxu0 0.0
        %658 = vmatpush.msra.mxu0 0.0
        %659 = vmatpush.msra.mxu0 0.0
        %660 = vmatpush.msra.mxu0 0.0
        %661 = vmatpush.msra.mxu0 0.0
        %662 = vmatpush.msra.mxu0 0.0
        %663 = vmatpush.msra.mxu0 0.0
        %664 = vmatpush.msra.mxu0 0.0
        %665 = vmatpush.msra.mxu0 0.0
        %666 = vmatpush.msra.mxu0 0.0
        %667 = vmatpush.msra.mxu0 0.0
        %668 = vmatpush.msra.mxu0 0.0
        %669 = vmatpush.msra.mxu0 0.0
        %670 = vmatpush.msra.mxu0 0.0
        %671 = vmatpush.msra.mxu0 0.0
        %672 = vmatpush.msra.mxu0 %v635
        %673 = vmatmul.f32.gmra.mxu0 %v630
        %v674 = vpop.f32.mrf.mxu0
        %v675 = vadd.f32 0.0, %v674
        %676 = vdwg.mxu0
        %v678 = vsel %vm628, %v625, 0
        %v681 = vsel %vm632, %v556, 0
        %v684 = vsel %vm632, %v557, 0
        %686 = vmatpush.msra.mxu0 0.0
        %687 = vmatpush.msra.mxu0 0.0
        %688 = vmatpush.msra.mxu0 0.0
        %689 = vmatpush.msra.mxu0 0.0
        %690 = vmatpush.msra.mxu0 0.0
        %691 = vmatpush.msra.mxu0 0.0
        %692 = vmatpush.msra.mxu0 0.0
        %693 = vmatpush.msra.mxu0 0.0
        %694 = vmatpush.msra.mxu0 0.0
        %695 = vmatpush.msra.mxu0 0.0
        %696 = vmatpush.msra.mxu0 0.0
        %697 = vmatpush.msra.mxu0 0.0
        %698 = vmatpush.msra.mxu0 0.0
        %699 = vmatpush.msra.mxu0 0.0
        %700 = vmatpush.msra.mxu0 0.0
        %701 = vmatpush.msra.mxu0 %v681
        %702 = vmatmul.f32.gmra.mxu0 %v678
        %v703 = vpop.f32.mrf.mxu0
        %v704 = vadd.f32 %v655, %v703
        %705 = vdwg.mxu0
        %706 = vmatpush.msra.mxu0 0.0
        %707 = vmatpush.msra.mxu0 0.0
        %708 = vmatpush.msra.mxu0 0.0
        %709 = vmatpush.msra.mxu0 0.0
        %710 = vmatpush.msra.mxu0 0.0
        %711 = vmatpush.msra.mxu0 0.0
        %712 = vmatpush.msra.mxu0 0.0
        %713 = vmatpush.msra.mxu0 0.0
        %714 = vmatpush.msra.mxu0 0.0
        %715 = vmatpush.msra.mxu0 0.0
        %716 = vmatpush.msra.mxu0 0.0
        %717 = vmatpush.msra.mxu0 0.0
        %718 = vmatpush.msra.mxu0 0.0
        %719 = vmatpush.msra.mxu0 0.0
        %720 = vmatpush.msra.mxu0 0.0
        %721 = vmatpush.msra.mxu0 %v684
        %722 = vmatmul.f32.gmra.mxu0 %v678
        %v723 = vpop.f32.mrf.mxu0
        %v724 = vadd.f32 %v675, %v723
        %725 = vdwg.mxu0
        %s726 = scalar_lea.vmem %s3, 8
        %v727 = vld [vmem:[%s726] sm:$0xf]
        %v729 = vsel %vm628, %v727, 0
        %v732 = vsel %vm632, %v563, 0
        %v735 = vsel %vm632, %v564, 0
        %737 = vmatpush.msra.mxu0 0.0
        %738 = vmatpush.msra.mxu0 0.0
        %739 = vmatpush.msra.mxu0 0.0
        %740 = vmatpush.msra.mxu0 0.0
        %741 = vmatpush.msra.mxu0 0.0
        %742 = vmatpush.msra.mxu0 0.0
        %743 = vmatpush.msra.mxu0 0.0
        %744 = vmatpush.msra.mxu0 0.0
        %745 = vmatpush.msra.mxu0 0.0
        %746 = vmatpush.msra.mxu0 0.0
        %747 = vmatpush.msra.mxu0 0.0
        %748 = vmatpush.msra.mxu0 0.0
        %749 = vmatpush.msra.mxu0 0.0
        %750 = vmatpush.msra.mxu0 0.0
        %751 = vmatpush.msra.mxu0 0.0
        %752 = vmatpush.msra.mxu0 %v732
        %753 = vmatmul.f32.gmra.mxu0 %v729
        %v754 = vpop.f32.mrf.mxu0
        %v755 = vadd.f32 0.0, %v754
        %756 = vdwg.mxu0
        %757 = vmatpush.msra.mxu0 0.0
        %758 = vmatpush.msra.mxu0 0.0
        %759 = vmatpush.msra.mxu0 0.0
        %760 = vmatpush.msra.mxu0 0.0
        %761 = vmatpush.msra.mxu0 0.0
        %762 = vmatpush.msra.mxu0 0.0
        %763 = vmatpush.msra.mxu0 0.0
        %764 = vmatpush.msra.mxu0 0.0
        %765 = vmatpush.msra.mxu0 0.0
        %766 = vmatpush.msra.mxu0 0.0
        %767 = vmatpush.msra.mxu0 0.0
        %768 = vmatpush.msra.mxu0 0.0
        %769 = vmatpush.msra.mxu0 0.0
        %770 = vmatpush.msra.mxu0 0.0
        %771 = vmatpush.msra.mxu0 0.0
        %772 = vmatpush.msra.mxu0 %v735
        %773 = vmatmul.f32.gmra.mxu0 %v729
        %v774 = vpop.f32.mrf.mxu0
        %v775 = vadd.f32 0.0, %v774
        %776 = vdwg.mxu0
        %v777 = vadd.f32 %v704, %v755
        %v778 = vadd.f32 %v724, %v775
        %s779 = scalar_lea.vmem %s3, 12
        %v780 = vld [vmem:[%s779] sm:$0xf]
        %v782 = vsel %vm628, %v780, 0
        %v785 = vsel %vm632, %v597, 0
        %v788 = vsel %vm632, %v598, 0
        %790 = vmatpush.msra.mxu0 0.0
        %791 = vmatpush.msra.mxu0 0.0
        %792 = vmatpush.msra.mxu0 0.0
        %793 = vmatpush.msra.mxu0 0.0
        %794 = vmatpush.msra.mxu0 0.0
        %795 = vmatpush.msra.mxu0 0.0
        %796 = vmatpush.msra.mxu0 0.0
        %797 = vmatpush.msra.mxu0 0.0
        %798 = vmatpush.msra.mxu0 0.0
        %799 = vmatpush.msra.mxu0 0.0
        %800 = vmatpush.msra.mxu0 0.0
        %801 = vmatpush.msra.mxu0 0.0
        %802 = vmatpush.msra.mxu0 0.0
        %803 = vmatpush.msra.mxu0 0.0
        %804 = vmatpush.msra.mxu0 0.0
        %805 = vmatpush.msra.mxu0 %v785
        %806 = vmatmul.f32.gmra.mxu0 %v782
        %v807 = vpop.f32.mrf.mxu0
        %v808 = vadd.f32 0.0, %v807
        %809 = vdwg.mxu0
        %810 = vmatpush.msra.mxu0 0.0
        %811 = vmatpush.msra.mxu0 0.0
        %812 = vmatpush.msra.mxu0 0.0
        %813 = vmatpush.msra.mxu0 0.0
        %814 = vmatpush.msra.mxu0 0.0
        %815 = vmatpush.msra.mxu0 0.0
        %816 = vmatpush.msra.mxu0 0.0
        %817 = vmatpush.msra.mxu0 0.0
        %818 = vmatpush.msra.mxu0 0.0
        %819 = vmatpush.msra.mxu0 0.0
        %820 = vmatpush.msra.mxu0 0.0
        %821 = vmatpush.msra.mxu0 0.0
        %822 = vmatpush.msra.mxu0 0.0
        %823 = vmatpush.msra.mxu0 0.0
        %824 = vmatpush.msra.mxu0 0.0
        %825 = vmatpush.msra.mxu0 %v788
        %826 = vmatmul.f32.gmra.mxu0 %v782
        %v827 = vpop.f32.mrf.mxu0
        %v828 = vadd.f32 0.0, %v827
        %829 = vdwg.mxu0
        %v830 = vadd.f32 %v777, %v808
        %v831 = vadd.f32 %v778, %v828
        %s832 = scalar_lea.vmem %s3, 16
        %v833 = vld [vmem:[%s832] sm:$0xf]
        %834 = vst [vmem:[#allocation1] ss:$2 sm:$0xff] %v473
        %v835 = vld.sshfl [vmem:[#allocation1] sm:$0xff pattern:$0x75316420]
        %v836 = vld.sshfl [vmem:[#allocation1 + $0x8] sm:$0xff pattern:$0x75316420]
        %v838 = vsel %vm628, %v833, 0
        %v840 = vsel %vm632, %v835, 0
        %v842 = vsel %vm632, %v836, 0
        %844 = vmatpush.msra.mxu0 0.0
        %845 = vmatpush.msra.mxu0 0.0
        %846 = vmatpush.msra.mxu0 0.0
        %847 = vmatpush.msra.mxu0 0.0
        %848 = vmatpush.msra.mxu0 0.0
        %849 = vmatpush.msra.mxu0 0.0
        %850 = vmatpush.msra.mxu0 0.0
        %851 = vmatpush.msra.mxu0 0.0
        %852 = vmatpush.msra.mxu0 0.0
        %853 = vmatpush.msra.mxu0 0.0
        %854 = vmatpush.msra.mxu0 0.0
        %855 = vmatpush.msra.mxu0 0.0
        %856 = vmatpush.msra.mxu0 0.0
        %857 = vmatpush.msra.mxu0 0.0
        %858 = vmatpush.msra.mxu0 0.0
        %859 = vmatpush.msra.mxu0 %v840
        %860 = vmatmul.f32.gmra.mxu0 %v838
        %v861 = vpop.f32.mrf.mxu0
        %v862 = vadd.f32 0.0, %v861
        %863 = vdwg.mxu0
        %864 = vmatpush.msra.mxu0 0.0
        %865 = vmatpush.msra.mxu0 0.0
        %866 = vmatpush.msra.mxu0 0.0
        %867 = vmatpush.msra.mxu0 0.0
        %868 = vmatpush.msra.mxu0 0.0
        %869 = vmatpush.msra.mxu0 0.0
        %870 = vmatpush.msra.mxu0 0.0
        %871 = vmatpush.msra.mxu0 0.0
        %872 = vmatpush.msra.mxu0 0.0
        %873 = vmatpush.msra.mxu0 0.0
        %874 = vmatpush.msra.mxu0 0.0
        %875 = vmatpush.msra.mxu0 0.0
        %876 = vmatpush.msra.mxu0 0.0
        %877 = vmatpush.msra.mxu0 0.0
        %878 = vmatpush.msra.mxu0 0.0
        %879 = vmatpush.msra.mxu0 %v842
        %880 = vmatmul.f32.gmra.mxu0 %v838
        %v881 = vpop.f32.mrf.mxu0
        %v882 = vadd.f32 0.0, %v881
        %883 = vdwg.mxu0
        %v884 = vadd.f32 %v830, %v862
        %v885 = vadd.f32 %v831, %v882
        %s886 = scalar_lea.vmem %s3, 20
        %v887 = vld [vmem:[%s886] sm:$0xf]
        %v889 = vsel %vm628, %v887, 0
        %v892 = vsel %vm632, %v599, 0
        %v895 = vsel %vm632, %v600, 0
        %897 = vmatpush.msra.mxu0 0.0
        %898 = vmatpush.msra.mxu0 0.0
        %899 = vmatpush.msra.mxu0 0.0
        %900 = vmatpush.msra.mxu0 0.0
        %901 = vmatpush.msra.mxu0 0.0
        %902 = vmatpush.msra.mxu0 0.0
        %903 = vmatpush.msra.mxu0 0.0
        %904 = vmatpush.msra.mxu0 0.0
        %905 = vmatpush.msra.mxu0 0.0
        %906 = vmatpush.msra.mxu0 0.0
        %907 = vmatpush.msra.mxu0 0.0
        %908 = vmatpush.msra.mxu0 0.0
        %909 = vmatpush.msra.mxu0 0.0
        %910 = vmatpush.msra.mxu0 0.0
        %911 = vmatpush.msra.mxu0 0.0
        %912 = vmatpush.msra.mxu0 %v892
        %913 = vmatmul.f32.gmra.mxu0 %v889
        %v914 = vpop.f32.mrf.mxu0
        %v915 = vadd.f32 0.0, %v914
        %916 = vdwg.mxu0
        %917 = vmatpush.msra.mxu0 0.0
        %918 = vmatpush.msra.mxu0 0.0
        %919 = vmatpush.msra.mxu0 0.0
        %920 = vmatpush.msra.mxu0 0.0
        %921 = vmatpush.msra.mxu0 0.0
        %922 = vmatpush.msra.mxu0 0.0
        %923 = vmatpush.msra.mxu0 0.0
        %924 = vmatpush.msra.mxu0 0.0
        %925 = vmatpush.msra.mxu0 0.0
        %926 = vmatpush.msra.mxu0 0.0
        %927 = vmatpush.msra.mxu0 0.0
        %928 = vmatpush.msra.mxu0 0.0
        %929 = vmatpush.msra.mxu0 0.0
        %930 = vmatpush.msra.mxu0 0.0
        %931 = vmatpush.msra.mxu0 0.0
        %932 = vmatpush.msra.mxu0 %v895
        %933 = vmatmul.f32.gmra.mxu0 %v889
        %v934 = vpop.f32.mrf.mxu0
        %v935 = vadd.f32 0.0, %v934
        %936 = vdwg.mxu0
        %v937 = vadd.f32 %v884, %v915
        %v938 = vadd.f32 %v885, %v935
        %s939 = scalar_lea.vmem %s3, 24
        %v940 = vld [vmem:[%s939] sm:$0xf]
        %v942 = vsel %vm628, %v940, 0
        %v945 = vsel %vm632, %v621, 0
        %v948 = vsel %vm632, %v622, 0
        %950 = vmatpush.msra.mxu0 0.0
        %951 = vmatpush.msra.mxu0 0.0
        %952 = vmatpush.msra.mxu0 0.0
        %953 = vmatpush.msra.mxu0 0.0
        %954 = vmatpush.msra.mxu0 0.0
        %955 = vmatpush.msra.mxu0 0.0
        %956 = vmatpush.msra.mxu0 0.0
        %957 = vmatpush.msra.mxu0 0.0
        %958 = vmatpush.msra.mxu0 0.0
        %959 = vmatpush.msra.mxu0 0.0
        %960 = vmatpush.msra.mxu0 0.0
        %961 = vmatpush.msra.mxu0 0.0
        %962 = vmatpush.msra.mxu0 0.0
        %963 = vmatpush.msra.mxu0 0.0
        %964 = vmatpush.msra.mxu0 0.0
        %965 = vmatpush.msra.mxu0 %v945
        %966 = vmatmul.f32.gmra.mxu0 %v942
        %v967 = vpop.f32.mrf.mxu0
        %v968 = vadd.f32 0.0, %v967
        %969 = vdwg.mxu0
        %970 = vmatpush.msra.mxu0 0.0
        %971 = vmatpush.msra.mxu0 0.0
        %972 = vmatpush.msra.mxu0 0.0
        %973 = vmatpush.msra.mxu0 0.0
        %974 = vmatpush.msra.mxu0 0.0
        %975 = vmatpush.msra.mxu0 0.0
        %976 = vmatpush.msra.mxu0 0.0
        %977 = vmatpush.msra.mxu0 0.0
        %978 = vmatpush.msra.mxu0 0.0
        %979 = vmatpush.msra.mxu0 0.0
        %980 = vmatpush.msra.mxu0 0.0
        %981 = vmatpush.msra.mxu0 0.0
        %982 = vmatpush.msra.mxu0 0.0
        %983 = vmatpush.msra.mxu0 0.0
        %984 = vmatpush.msra.mxu0 0.0
        %985 = vmatpush.msra.mxu0 %v948
        %986 = vmatmul.f32.gmra.mxu0 %v942
        %v987 = vpop.f32.mrf.mxu0
        %v988 = vadd.f32 0.0, %v987
        %989 = vdwg.mxu0
        %v990 = vadd.f32 %v937, %v968
        %v991 = vadd.f32 %v938, %v988
        %s992 = scalar_lea.vmem %s3, 28
        %v993 = vld [vmem:[%s992] sm:$0xf]
        %v995 = vsel %vm628, %v993, 0
        %v997 = vsel %vm632, %v527, 0
        %v999 = vsel %vm632, %v528, 0
        %1001 = vmatpush.msra.mxu0 0.0
        %1002 = vmatpush.msra.mxu0 0.0
        %1003 = vmatpush.msra.mxu0 0.0
        %1004 = vmatpush.msra.mxu0 0.0
        %1005 = vmatpush.msra.mxu0 0.0
        %1006 = vmatpush.msra.mxu0 0.0
        %1007 = vmatpush.msra.mxu0 0.0
        %1008 = vmatpush.msra.mxu0 0.0
        %1009 = vmatpush.msra.mxu0 0.0
        %1010 = vmatpush.msra.mxu0 0.0
        %1011 = vmatpush.msra.mxu0 0.0
        %1012 = vmatpush.msra.mxu0 0.0
        %1013 = vmatpush.msra.mxu0 0.0
        %1014 = vmatpush.msra.mxu0 0.0
        %1015 = vmatpush.msra.mxu0 0.0
        %1016 = vmatpush.msra.mxu0 %v997
        %1017 = vmatmul.f32.gmra.mxu0 %v995
        %v1018 = vpop.f32.mrf.mxu0
        %v1019 = vadd.f32 0.0, %v1018
        %1020 = vdwg.mxu0
        %1021 = vmatpush.msra.mxu0 0.0
        %1022 = vmatpush.msra.mxu0 0.0
        %1023 = vmatpush.msra.mxu0 0.0
        %1024 = vmatpush.msra.mxu0 0.0
        %1025 = vmatpush.msra.mxu0 0.0
        %1026 = vmatpush.msra.mxu0 0.0
        %1027 = vmatpush.msra.mxu0 0.0
        %1028 = vmatpush.msra.mxu0 0.0
        %1029 = vmatpush.msra.mxu0 0.0
        %1030 = vmatpush.msra.mxu0 0.0
        %1031 = vmatpush.msra.mxu0 0.0
        %1032 = vmatpush.msra.mxu0 0.0
        %1033 = vmatpush.msra.mxu0 0.0
        %1034 = vmatpush.msra.mxu0 0.0
        %1035 = vmatpush.msra.mxu0 0.0
        %1036 = vmatpush.msra.mxu0 %v999
        %1037 = vmatmul.f32.gmra.mxu0 %v995
        %v1038 = vpop.f32.mrf.mxu0
        %v1039 = vadd.f32 0.0, %v1038
        %1040 = vdwg.mxu0
        %v1041 = vadd.f32 %v990, %v1019
        %v1042 = vadd.f32 %v991, %v1039
        %s1043 = scalar_lea.vmem %s3, 32
        %v1044 = vld [vmem:[%s1043] sm:$0xf]
        %v1046 = vsel %vm628, %v1044, 0
        %v1049 = vsel %vm632, %v623, 0
        %v1052 = vsel %vm632, %v624, 0
        %1054 = vmatpush.msra.mxu0 0.0
        %1055 = vmatpush.msra.mxu0 0.0
        %1056 = vmatpush.msra.mxu0 0.0
        %1057 = vmatpush.msra.mxu0 0.0
        %1058 = vmatpush.msra.mxu0 0.0
        %1059 = vmatpush.msra.mxu0 0.0
        %1060 = vmatpush.msra.mxu0 0.0
        %1061 = vmatpush.msra.mxu0 0.0
        %1062 = vmatpush.msra.mxu0 0.0
        %1063 = vmatpush.msra.mxu0 0.0
        %1064 = vmatpush.msra.mxu0 0.0
        %1065 = vmatpush.msra.mxu0 0.0
        %1066 = vmatpush.msra.mxu0 0.0
        %1067 = vmatpush.msra.mxu0 0.0
        %1068 = vmatpush.msra.mxu0 0.0
        %1069 = vmatpush.msra.mxu0 %v1049
        %1070 = vmatmul.f32.gmra.mxu0 %v1046
        %v1071 = vpop.f32.mrf.mxu0
        %v1072 = vadd.f32 0.0, %v1071
        %1073 = vdwg.mxu0
        %1074 = vmatpush.msra.mxu0 0.0
        %1075 = vmatpush.msra.mxu0 0.0
        %1076 = vmatpush.msra.mxu0 0.0
        %1077 = vmatpush.msra.mxu0 0.0
        %1078 = vmatpush.msra.mxu0 0.0
        %1079 = vmatpush.msra.mxu0 0.0
        %1080 = vmatpush.msra.mxu0 0.0
        %1081 = vmatpush.msra.mxu0 0.0
        %1082 = vmatpush.msra.mxu0 0.0
        %1083 = vmatpush.msra.mxu0 0.0
        %1084 = vmatpush.msra.mxu0 0.0
        %1085 = vmatpush.msra.mxu0 0.0
        %1086 = vmatpush.msra.mxu0 0.0
        %1087 = vmatpush.msra.mxu0 0.0
        %1088 = vmatpush.msra.mxu0 0.0
        %1089 = vmatpush.msra.mxu0 %v1052
        %1090 = vmatmul.f32.gmra.mxu0 %v1046
        %v1091 = vpop.f32.mrf.mxu0
        %v1092 = vadd.f32 0.0, %v1091
        %1093 = vdwg.mxu0
        %v1094 = vadd.f32 %v1041, %v1072
        %v1095 = vadd.f32 %v1042, %v1092
        %v1096 = vsel %vm632, %v1094, 0.0
        %v1097 = vsel %vm632, %v1095, 0.0
        %v1098 = vadd.f32 %v1096, %v1097
        %1099 = vadd.xlane.f32.xlu0 %v1098
        %v1100 = vpop.xlane.xlu0 %1099
        %v1101 = vmul.f32 %v1094, %v1094
        %v1102 = vmul.f32 %v1095, %v1095
        %v1103 = vsel %vm632, %v1101, 0.0
        %v1104 = vsel %vm632, %v1102, 0.0
        %v1105 = vadd.f32 %v1103, %v1104
        %1106 = vadd.xlane.f32.xlu0 %v1105
        %v1107 = vpop.xlane.xlu0 %1106
        %v1108 = vmul.f32 %v1100, 0.00390625
        %v1109 = vmul.f32 %v1107, 0.00390625
        %v1110 = vmul.f32 %v1108, %v1108
        %v1111 = vsub.f32 %v1109, %v1110
        %v1112 = vmax.f32 %v1111, 0.0
        %v1113 = vsub.f32 %v1094, %v1108
        %v1114 = vsub.f32 %v1095, %v1108
        %v1115 = vadd.f32 %v1112, 1e-05
        %v1116 = vrsqrt.pop %v1115
        %v1117 = vmul.f32 %v1116, %v1115
        %v1118 = vmul.f32 %v1117, %v1116
        %v1119 = vmul.f32 0.5, %v1118
        %v1120 = vsub.f32 1.5, %v1119
        %v1121 = vmul.f32 %v1116, %v1120
        %vm1122 = vweird.f32 %v1115
        %vm1123 = vweird.f32 %v1116
        %vm1124 = vmor %vm1122, %vm1123
        %v1125 = vsel %vm1124, %v1116, %v1121
        %v1126 = vmul.f32 %v1113, %v1125
        %v1127 = vmul.f32 %v1114, %v1125
        %v1128 = vld [vmem:[%s468] sm:$0xff]
        %v1129 = vld [vmem:[%s7] sm:$0xff]
        %1131 = vset.pattern.permute.xlu0 0
        %1132 = vperm.xlu0 %1131, %v1128
        %v1133 = vpop.permute.xlu0 %1132
        %v1136 = vsel %vm628, %v1129, 0
        %v1139 = vsel %vm632, %v1126, 0
        %v1142 = vsel %vm632, %v1127, 0
        %1144 = vmatpush.msra.mxu0 0.0
        %1145 = vmatpush.msra.mxu0 0.0
        %1146 = vmatpush.msra.mxu0 0.0
        %1147 = vmatpush.msra.mxu0 0.0
        %1148 = vmatpush.msra.mxu0 0.0
        %1149 = vmatpush.msra.mxu0 0.0
        %1150 = vmatpush.msra.mxu0 0.0
        %1151 = vmatpush.msra.mxu0 0.0
        %1152 = vmatpush.msra.mxu0 0.0
        %1153 = vmatpush.msra.mxu0 0.0
        %1154 = vmatpush.msra.mxu0 0.0
        %1155 = vmatpush.msra.mxu0 0.0
        %1156 = vmatpush.msra.mxu0 0.0
        %1157 = vmatpush.msra.mxu0 0.0
        %1158 = vmatpush.msra.mxu0 0.0
        %1159 = vmatpush.msra.mxu0 %v1139
        %1160 = vmatmul.f32.gmra.mxu0 %v1136
        %v1161 = vpop.f32.mrf.mxu0
        %v1162 = vadd.f32 %v1133, %v1161
        %1163 = vdwg.mxu0
        %1164 = vmatpush.msra.mxu0 0.0
        %1165 = vmatpush.msra.mxu0 0.0
        %1166 = vmatpush.msra.mxu0 0.0
        %1167 = vmatpush.msra.mxu0 0.0
        %1168 = vmatpush.msra.mxu0 0.0
        %1169 = vmatpush.msra.mxu0 0.0
        %1170 = vmatpush.msra.mxu0 0.0
        %1171 = vmatpush.msra.mxu0 0.0
        %1172 = vmatpush.msra.mxu0 0.0
        %1173 = vmatpush.msra.mxu0 0.0
        %1174 = vmatpush.msra.mxu0 0.0
        %1175 = vmatpush.msra.mxu0 0.0
        %1176 = vmatpush.msra.mxu0 0.0
        %1177 = vmatpush.msra.mxu0 0.0
        %1178 = vmatpush.msra.mxu0 0.0
        %1179 = vmatpush.msra.mxu0 %v1142
        %1180 = vmatmul.f32.gmra.mxu0 %v1136
        %v1181 = vpop.f32.mrf.mxu0
        %v1182 = vadd.f32 %v1133, %v1181
        %1183 = vdwg.mxu0
        %v1184 = vmax.f32 %v1162, 0.0
        %v1185 = vmax.f32 %v1182, 0.0
        %v1186 = vld [vmem:[%s8] sm:$0xf]
        %v1187 = vld [vmem:[%s9] sm:$0xf]
        %1189 = vset.pattern.permute.xlu0 0
        %1190 = vperm.xlu0 %1189, %v1187
        %v1191 = vpop.permute.xlu0 %1190
        %vm1193 = vcmask 64512
        %v1195 = vsel %vm1193, %v1186, 0
        %1197 = vmatpush.msra.mxu0 0.0
        %1198 = vmatpush.msra.mxu0 0.0
        %1199 = vmatpush.msra.mxu0 0.0
        %1200 = vmatpush.msra.mxu0 0.0
        %1201 = vmatpush.msra.mxu0 0.0
        %1202 = vmatpush.msra.mxu0 0.0
        %1203 = vmatpush.msra.mxu0 0.0
        %1204 = vmatpush.msra.mxu0 0.0
        %1205 = vmatpush.msra.mxu0 0.0
        %1206 = vmatpush.msra.mxu0 0.0
        %1207 = vmatpush.msra.mxu0 0.0
        %1208 = vmatpush.msra.mxu0 0.0
        %1209 = vmatpush.msra.mxu0 0.0
        %1210 = vmatpush.msra.mxu0 0.0
        %1211 = vmatpush.msra.mxu0 0.0
        %1212 = vmatpush.msra.mxu0 %v1184
        %1213 = vmatmul.f32.gmra.mxu0 %v1195
        %v1214 = vpop.f32.mrf.mxu0
        %v1215 = vadd.f32 %v1191, %v1214
        %1216 = vdwg.mxu0
        %1217 = vmatpush.msra.mxu0 0.0
        %1218 = vmatpush.msra.mxu0 0.0
        %1219 = vmatpush.msra.mxu0 0.0
        %1220 = vmatpush.msra.mxu0 0.0
        %1221 = vmatpush.msra.mxu0 0.0
        %1222 = vmatpush.msra.mxu0 0.0
        %1223 = vmatpush.msra.mxu0 0.0
        %1224 = vmatpush.msra.mxu0 0.0
        %1225 = vmatpush.msra.mxu0 0.0
        %1226 = vmatpush.msra.mxu0 0.0
        %1227 = vmatpush.msra.mxu0 0.0
        %1228 = vmatpush.msra.mxu0 0.0
        %1229 = vmatpush.msra.mxu0 0.0
        %1230 = vmatpush.msra.mxu0 0.0
        %1231 = vmatpush.msra.mxu0 0.0
        %1232 = vmatpush.msra.mxu0 %v1185
        %1233 = vmatmul.f32.gmra.mxu0 %v1195
        %v1234 = vpop.f32.mrf.mxu0
        %v1235 = vadd.f32 %v1191, %v1234
        %1236 = vdwg.mxu0
        %v1237 = vmax.f32 %v1215, 0.0
        %v1238 = vmax.f32 %v1235, 0.0
        %1240 = vrot.lane.b32.xlu0 %v1238, 16
        %v1241 = vpop.permute.xlu0 %1240
        %1244 = vrot.lane.b32.xlu0 %v1237, 16
        %v1245 = vpop.permute.xlu0 %1244
        %v1246 = vsel %vm493, %v1245, %v1241
        %v1249 = vsel %vm493, %v1241, %v1245
        %1250 = vrot.lane.b32.xlu0 %v1237, 112
        %v1251 = vpop.permute.xlu0 %1250
        %1252 = vrot.lane.b32.xlu0 %v1238, 112
        %v1253 = vpop.permute.xlu0 %1252
        %v1254 = vsel %vm505, %v1251, %v1253
        %v1258 = vsel %vm505, %v1253, %v1251
        %v1259 = vsel %vm518, %v1254, %v1249
        %v1260 = vsel %vm519, %v1258, %v1246
        %v1261 = vsel %vm525, %v1249, %v1254
        %v1262 = vsel %vm526, %v1246, %v1258
        %1264 = vrot.lane.b32.xlu0 %v1260, 1
        %v1265 = vpop.permute.xlu0 %1264
        %1268 = vrot.lane.b32.xlu0 %v1259, 1
        %v1269 = vpop.permute.xlu0 %1268
        %v1270 = vsel %vm536, %v1269, %v1265
        %v1273 = vsel %vm536, %v1265, %v1269
        %1274 = vrot.lane.b32.xlu0 %v1259, 127
        %v1275 = vpop.permute.xlu0 %1274
        %1276 = vrot.lane.b32.xlu0 %v1260, 127
        %v1277 = vpop.permute.xlu0 %1276
        %v1278 = vsel %vm545, %v1275, %v1277
        %v1282 = vsel %vm545, %v1277, %v1275
        %v1283 = vsel %vm554, %v1278, %v1273
        %v1284 = vsel %vm555, %v1282, %v1270
        %v1285 = vsel %vm561, %v1273, %v1278
        %v1286 = vsel %vm562, %v1270, %v1282
        %1287 = vrot.lane.b32.xlu0 %v1238, 1
        %v1288 = vpop.permute.xlu0 %1287
        %1290 = vrot.lane.b32.xlu0 %v1237, 1
        %v1291 = vpop.permute.xlu0 %1290
        %v1292 = vsel %vm536, %v1291, %v1288
        %v1295 = vsel %vm536, %v1288, %v1291
        %1296 = vrot.lane.b32.xlu0 %v1237, 127
        %v1297 = vpop.permute.xlu0 %1296
        %1298 = vrot.lane.b32.xlu0 %v1238, 127
        %v1299 = vpop.permute.xlu0 %1298
        %v1300 = vsel %vm545, %v1297, %v1299
        %v1304 = vsel %vm545, %v1299, %v1297
        %v1305 = vsel %vm554, %v1300, %v1295
        %v1306 = vsel %vm555, %v1304, %v1292
        %v1307 = vsel %vm561, %v1295, %v1300
        %v1308 = vsel %vm562, %v1292, %v1304
        %1310 = vrot.lane.b32.xlu0 %v1262, 1
        %v1311 = vpop.permute.xlu0 %1310
        %1314 = vrot.lane.b32.xlu0 %v1261, 1
        %v1315 = vpop.permute.xlu0 %1314
        %v1316 = vsel %vm536, %v1315, %v1311
        %v1319 = vsel %vm536, %v1311, %v1315
        %1320 = vrot.lane.b32.xlu0 %v1261, 127
        %v1321 = vpop.permute.xlu0 %1320
        %1322 = vrot.lane.b32.xlu0 %v1262, 127
        %v1323 = vpop.permute.xlu0 %1322
        %v1324 = vsel %vm545, %v1321, %v1323
        %v1328 = vsel %vm545, %v1323, %v1321
        %v1329 = vsel %vm554, %v1324, %v1319
        %v1330 = vsel %vm555, %v1328, %v1316
        %v1331 = vsel %vm561, %v1319, %v1324
        %v1332 = vsel %vm562, %v1316, %v1328
        %v1333 = vld [vmem:[%s4] sm:$0xf]
        %s1334 = scalar_lea.vmem %s4, 4
        %v1335 = vld [vmem:[%s1334] sm:$0xf]
        %v1337 = vsel %vm628, %v1335, 0
        %v1339 = vsel %vm632, %v1259, 0
        %v1341 = vsel %vm632, %v1260, 0
        %1343 = vmatpush.msra.mxu0 0.0
        %1344 = vmatpush.msra.mxu0 0.0
        %1345 = vmatpush.msra.mxu0 0.0
        %1346 = vmatpush.msra.mxu0 0.0
        %1347 = vmatpush.msra.mxu0 0.0
        %1348 = vmatpush.msra.mxu0 0.0
        %1349 = vmatpush.msra.mxu0 0.0
        %1350 = vmatpush.msra.mxu0 0.0
        %1351 = vmatpush.msra.mxu0 0.0
        %1352 = vmatpush.msra.mxu0 0.0
        %1353 = vmatpush.msra.mxu0 0.0
        %1354 = vmatpush.msra.mxu0 0.0
        %1355 = vmatpush.msra.mxu0 0.0
        %1356 = vmatpush.msra.mxu0 0.0
        %1357 = vmatpush.msra.mxu0 0.0
        %1358 = vmatpush.msra.mxu0 %v1339
        %1359 = vmatmul.f32.gmra.mxu0 %v1337
        %v1360 = vpop.f32.mrf.mxu0
        %v1361 = vadd.f32 0.0, %v1360
        %1362 = vdwg.mxu0
        %1363 = vmatpush.msra.mxu0 0.0
        %1364 = vmatpush.msra.mxu0 0.0
        %1365 = vmatpush.msra.mxu0 0.0
        %1366 = vmatpush.msra.mxu0 0.0
        %1367 = vmatpush.msra.mxu0 0.0
        %1368 = vmatpush.msra.mxu0 0.0
        %1369 = vmatpush.msra.mxu0 0.0
        %1370 = vmatpush.msra.mxu0 0.0
        %1371 = vmatpush.msra.mxu0 0.0
        %1372 = vmatpush.msra.mxu0 0.0
        %1373 = vmatpush.msra.mxu0 0.0
        %1374 = vmatpush.msra.mxu0 0.0
        %1375 = vmatpush.msra.mxu0 0.0
        %1376 = vmatpush.msra.mxu0 0.0
        %1377 = vmatpush.msra.mxu0 0.0
        %1378 = vmatpush.msra.mxu0 %v1341
        %1379 = vmatmul.f32.gmra.mxu0 %v1337
        %v1380 = vpop.f32.mrf.mxu0
        %v1381 = vadd.f32 0.0, %v1380
        %1382 = vdwg.mxu0
        %v1384 = vsel %vm628, %v1333, 0
        %v1387 = vsel %vm632, %v1283, 0
        %v1390 = vsel %vm632, %v1284, 0
        %1392 = vmatpush.msra.mxu0 0.0
        %1393 = vmatpush.msra.mxu0 0.0
        %1394 = vmatpush.msra.mxu0 0.0
        %1395 = vmatpush.msra.mxu0 0.0
        %1396 = vmatpush.msra.mxu0 0.0
        %1397 = vmatpush.msra.mxu0 0.0
        %1398 = vmatpush.msra.mxu0 0.0
        %1399 = vmatpush.msra.mxu0 0.0
        %1400 = vmatpush.msra.mxu0 0.0
        %1401 = vmatpush.msra.mxu0 0.0
        %1402 = vmatpush.msra.mxu0 0.0
        %1403 = vmatpush.msra.mxu0 0.0
        %1404 = vmatpush.msra.mxu0 0.0
        %1405 = vmatpush.msra.mxu0 0.0
        %1406 = vmatpush.msra.mxu0 0.0
        %1407 = vmatpush.msra.mxu0 %v1387
        %1408 = vmatmul.f32.gmra.mxu0 %v1384
        %v1409 = vpop.f32.mrf.mxu0
        %v1410 = vadd.f32 %v1361, %v1409
        %1411 = vdwg.mxu0
        %1412 = vmatpush.msra.mxu0 0.0
        %1413 = vmatpush.msra.mxu0 0.0
        %1414 = vmatpush.msra.mxu0 0.0
        %1415 = vmatpush.msra.mxu0 0.0
        %1416 = vmatpush.msra.mxu0 0.0
        %1417 = vmatpush.msra.mxu0 0.0
        %1418 = vmatpush.msra.mxu0 0.0
        %1419 = vmatpush.msra.mxu0 0.0
        %1420 = vmatpush.msra.mxu0 0.0
        %1421 = vmatpush.msra.mxu0 0.0
        %1422 = vmatpush.msra.mxu0 0.0
        %1423 = vmatpush.msra.mxu0 0.0
        %1424 = vmatpush.msra.mxu0 0.0
        %1425 = vmatpush.msra.mxu0 0.0
        %1426 = vmatpush.msra.mxu0 0.0
        %1427 = vmatpush.msra.mxu0 %v1390
        %1428 = vmatmul.f32.gmra.mxu0 %v1384
        %v1429 = vpop.f32.mrf.mxu0
        %v1430 = vadd.f32 %v1381, %v1429
        %1431 = vdwg.mxu0
        %s1432 = scalar_lea.vmem %s4, 8
        %v1433 = vld [vmem:[%s1432] sm:$0xf]
        %v1435 = vsel %vm628, %v1433, 0
        %v1438 = vsel %vm632, %v1285, 0
        %v1441 = vsel %vm632, %v1286, 0
        %1443 = vmatpush.msra.mxu0 0.0
        %1444 = vmatpush.msra.mxu0 0.0
        %1445 = vmatpush.msra.mxu0 0.0
        %1446 = vmatpush.msra.mxu0 0.0
        %1447 = vmatpush.msra.mxu0 0.0
        %1448 = vmatpush.msra.mxu0 0.0
        %1449 = vmatpush.msra.mxu0 0.0
        %1450 = vmatpush.msra.mxu0 0.0
        %1451 = vmatpush.msra.mxu0 0.0
        %1452 = vmatpush.msra.mxu0 0.0
        %1453 = vmatpush.msra.mxu0 0.0
        %1454 = vmatpush.msra.mxu0 0.0
        %1455 = vmatpush.msra.mxu0 0.0
        %1456 = vmatpush.msra.mxu0 0.0
        %1457 = vmatpush.msra.mxu0 0.0
        %1458 = vmatpush.msra.mxu0 %v1438
        %1459 = vmatmul.f32.gmra.mxu0 %v1435
        %v1460 = vpop.f32.mrf.mxu0
        %v1461 = vadd.f32 0.0, %v1460
        %1462 = vdwg.mxu0
        %1463 = vmatpush.msra.mxu0 0.0
        %1464 = vmatpush.msra.mxu0 0.0
        %1465 = vmatpush.msra.mxu0 0.0
        %1466 = vmatpush.msra.mxu0 0.0
        %1467 = vmatpush.msra.mxu0 0.0
        %1468 = vmatpush.msra.mxu0 0.0
        %1469 = vmatpush.msra.mxu0 0.0
        %1470 = vmatpush.msra.mxu0 0.0
        %1471 = vmatpush.msra.mxu0 0.0
        %1472 = vmatpush.msra.mxu0 0.0
        %1473 = vmatpush.msra.mxu0 0.0
        %1474 = vmatpush.msra.mxu0 0.0
        %1475 = vmatpush.msra.mxu0 0.0
        %1476 = vmatpush.msra.mxu0 0.0
        %1477 = vmatpush.msra.mxu0 0.0
        %1478 = vmatpush.msra.mxu0 %v1441
        %1479 = vmatmul.f32.gmra.mxu0 %v1435
        %v1480 = vpop.f32.mrf.mxu0
        %v1481 = vadd.f32 0.0, %v1480
        %1482 = vdwg.mxu0
        %v1483 = vadd.f32 %v1410, %v1461
        %v1484 = vadd.f32 %v1430, %v1481
        %s1485 = scalar_lea.vmem %s4, 12
        %v1486 = vld [vmem:[%s1485] sm:$0xf]
        %v1488 = vsel %vm628, %v1486, 0
        %v1491 = vsel %vm632, %v1305, 0
        %v1494 = vsel %vm632, %v1306, 0
        %1496 = vmatpush.msra.mxu0 0.0
        %1497 = vmatpush.msra.mxu0 0.0
        %1498 = vmatpush.msra.mxu0 0.0
        %1499 = vmatpush.msra.mxu0 0.0
        %1500 = vmatpush.msra.mxu0 0.0
        %1501 = vmatpush.msra.mxu0 0.0
        %1502 = vmatpush.msra.mxu0 0.0
        %1503 = vmatpush.msra.mxu0 0.0
        %1504 = vmatpush.msra.mxu0 0.0
        %1505 = vmatpush.msra.mxu0 0.0
        %1506 = vmatpush.msra.mxu0 0.0
        %1507 = vmatpush.msra.mxu0 0.0
        %1508 = vmatpush.msra.mxu0 0.0
        %1509 = vmatpush.msra.mxu0 0.0
        %1510 = vmatpush.msra.mxu0 0.0
        %1511 = vmatpush.msra.mxu0 %v1491
        %1512 = vmatmul.f32.gmra.mxu0 %v1488
        %v1513 = vpop.f32.mrf.mxu0
        %v1514 = vadd.f32 0.0, %v1513
        %1515 = vdwg.mxu0
        %1516 = vmatpush.msra.mxu0 0.0
        %1517 = vmatpush.msra.mxu0 0.0
        %1518 = vmatpush.msra.mxu0 0.0
        %1519 = vmatpush.msra.mxu0 0.0
        %1520 = vmatpush.msra.mxu0 0.0
        %1521 = vmatpush.msra.mxu0 0.0
        %1522 = vmatpush.msra.mxu0 0.0
        %1523 = vmatpush.msra.mxu0 0.0
        %1524 = vmatpush.msra.mxu0 0.0
        %1525 = vmatpush.msra.mxu0 0.0
        %1526 = vmatpush.msra.mxu0 0.0
        %1527 = vmatpush.msra.mxu0 0.0
        %1528 = vmatpush.msra.mxu0 0.0
        %1529 = vmatpush.msra.mxu0 0.0
        %1530 = vmatpush.msra.mxu0 0.0
        %1531 = vmatpush.msra.mxu0 %v1494
        %1532 = vmatmul.f32.gmra.mxu0 %v1488
        %v1533 = vpop.f32.mrf.mxu0
        %v1534 = vadd.f32 0.0, %v1533
        %1535 = vdwg.mxu0
        %v1536 = vadd.f32 %v1483, %v1514
        %v1537 = vadd.f32 %v1484, %v1534
        %s1538 = scalar_lea.vmem %s4, 16
        %v1539 = vld [vmem:[%s1538] sm:$0xf]
        %v1541 = vsel %vm628, %v1539, 0
        %v1543 = vsel %vm632, %v1237, 0
        %v1545 = vsel %vm632, %v1238, 0
        %1547 = vmatpush.msra.mxu0 0.0
        %1548 = vmatpush.msra.mxu0 0.0
        %1549 = vmatpush.msra.mxu0 0.0
        %1550 = vmatpush.msra.mxu0 0.0
        %1551 = vmatpush.msra.mxu0 0.0
        %1552 = vmatpush.msra.mxu0 0.0
        %1553 = vmatpush.msra.mxu0 0.0
        %1554 = vmatpush.msra.mxu0 0.0
        %1555 = vmatpush.msra.mxu0 0.0
        %1556 = vmatpush.msra.mxu0 0.0
        %1557 = vmatpush.msra.mxu0 0.0
        %1558 = vmatpush.msra.mxu0 0.0
        %1559 = vmatpush.msra.mxu0 0.0
        %1560 = vmatpush.msra.mxu0 0.0
        %1561 = vmatpush.msra.mxu0 0.0
        %1562 = vmatpush.msra.mxu0 %v1543
        %1563 = vmatmul.f32.gmra.mxu0 %v1541
        %v1564 = vpop.f32.mrf.mxu0
        %v1565 = vadd.f32 0.0, %v1564
        %1566 = vdwg.mxu0
        %1567 = vmatpush.msra.mxu0 0.0
        %1568 = vmatpush.msra.mxu0 0.0
        %1569 = vmatpush.msra.mxu0 0.0
        %1570 = vmatpush.msra.mxu0 0.0
        %1571 = vmatpush.msra.mxu0 0.0
        %1572 = vmatpush.msra.mxu0 0.0
        %1573 = vmatpush.msra.mxu0 0.0
        %1574 = vmatpush.msra.mxu0 0.0
        %1575 = vmatpush.msra.mxu0 0.0
        %1576 = vmatpush.msra.mxu0 0.0
        %1577 = vmatpush.msra.mxu0 0.0
        %1578 = vmatpush.msra.mxu0 0.0
        %1579 = vmatpush.msra.mxu0 0.0
        %1580 = vmatpush.msra.mxu0 0.0
        %1581 = vmatpush.msra.mxu0 0.0
        %1582 = vmatpush.msra.mxu0 %v1545
        %1583 = vmatmul.f32.gmra.mxu0 %v1541
        %v1584 = vpop.f32.mrf.mxu0
        %v1585 = vadd.f32 0.0, %v1584
        %1586 = vdwg.mxu0
        %v1587 = vadd.f32 %v1536, %v1565
        %v1588 = vadd.f32 %v1537, %v1585
        %s1589 = scalar_lea.vmem %s4, 20
        %v1590 = vld [vmem:[%s1589] sm:$0xf]
        %v1592 = vsel %vm628, %v1590, 0
        %v1595 = vsel %vm632, %v1307, 0
        %v1598 = vsel %vm632, %v1308, 0
        %1600 = vmatpush.msra.mxu0 0.0
        %1601 = vmatpush.msra.mxu0 0.0
        %1602 = vmatpush.msra.mxu0 0.0
        %1603 = vmatpush.msra.mxu0 0.0
        %1604 = vmatpush.msra.mxu0 0.0
        %1605 = vmatpush.msra.mxu0 0.0
        %1606 = vmatpush.msra.mxu0 0.0
        %1607 = vmatpush.msra.mxu0 0.0
        %1608 = vmatpush.msra.mxu0 0.0
        %1609 = vmatpush.msra.mxu0 0.0
        %1610 = vmatpush.msra.mxu0 0.0
        %1611 = vmatpush.msra.mxu0 0.0
        %1612 = vmatpush.msra.mxu0 0.0
        %1613 = vmatpush.msra.mxu0 0.0
        %1614 = vmatpush.msra.mxu0 0.0
        %1615 = vmatpush.msra.mxu0 %v1595
        %1616 = vmatmul.f32.gmra.mxu0 %v1592
        %v1617 = vpop.f32.mrf.mxu0
        %v1618 = vadd.f32 0.0, %v1617
        %1619 = vdwg.mxu0
        %1620 = vmatpush.msra.mxu0 0.0
        %1621 = vmatpush.msra.mxu0 0.0
        %1622 = vmatpush.msra.mxu0 0.0
        %1623 = vmatpush.msra.mxu0 0.0
        %1624 = vmatpush.msra.mxu0 0.0
        %1625 = vmatpush.msra.mxu0 0.0
        %1626 = vmatpush.msra.mxu0 0.0
        %1627 = vmatpush.msra.mxu0 0.0
        %1628 = vmatpush.msra.mxu0 0.0
        %1629 = vmatpush.msra.mxu0 0.0
        %1630 = vmatpush.msra.mxu0 0.0
        %1631 = vmatpush.msra.mxu0 0.0
        %1632 = vmatpush.msra.mxu0 0.0
        %1633 = vmatpush.msra.mxu0 0.0
        %1634 = vmatpush.msra.mxu0 0.0
        %1635 = vmatpush.msra.mxu0 %v1598
        %1636 = vmatmul.f32.gmra.mxu0 %v1592
        %v1637 = vpop.f32.mrf.mxu0
        %v1638 = vadd.f32 0.0, %v1637
        %1639 = vdwg.mxu0
        %v1640 = vadd.f32 %v1587, %v1618
        %v1641 = vadd.f32 %v1588, %v1638
        %s1642 = scalar_lea.vmem %s4, 24
        %v1643 = vld [vmem:[%s1642] sm:$0xf]
        %v1645 = vsel %vm628, %v1643, 0
        %v1648 = vsel %vm632, %v1329, 0
        %v1651 = vsel %vm632, %v1330, 0
        %1653 = vmatpush.msra.mxu0 0.0
        %1654 = vmatpush.msra.mxu0 0.0
        %1655 = vmatpush.msra.mxu0 0.0
        %1656 = vmatpush.msra.mxu0 0.0
        %1657 = vmatpush.msra.mxu0 0.0
        %1658 = vmatpush.msra.mxu0 0.0
        %1659 = vmatpush.msra.mxu0 0.0
        %1660 = vmatpush.msra.mxu0 0.0
        %1661 = vmatpush.msra.mxu0 0.0
        %1662 = vmatpush.msra.mxu0 0.0
        %1663 = vmatpush.msra.mxu0 0.0
        %1664 = vmatpush.msra.mxu0 0.0
        %1665 = vmatpush.msra.mxu0 0.0
        %1666 = vmatpush.msra.mxu0 0.0
        %1667 = vmatpush.msra.mxu0 0.0
        %1668 = vmatpush.msra.mxu0 %v1648
        %1669 = vmatmul.f32.gmra.mxu0 %v1645
        %v1670 = vpop.f32.mrf.mxu0
        %v1671 = vadd.f32 0.0, %v1670
        %1672 = vdwg.mxu0
        %1673 = vmatpush.msra.mxu0 0.0
        %1674 = vmatpush.msra.mxu0 0.0
        %1675 = vmatpush.msra.mxu0 0.0
        %1676 = vmatpush.msra.mxu0 0.0
        %1677 = vmatpush.msra.mxu0 0.0
        %1678 = vmatpush.msra.mxu0 0.0
        %1679 = vmatpush.msra.mxu0 0.0
        %1680 = vmatpush.msra.mxu0 0.0
        %1681 = vmatpush.msra.mxu0 0.0
        %1682 = vmatpush.msra.mxu0 0.0
        %1683 = vmatpush.msra.mxu0 0.0
        %1684 = vmatpush.msra.mxu0 0.0
        %1685 = vmatpush.msra.mxu0 0.0
        %1686 = vmatpush.msra.mxu0 0.0
        %1687 = vmatpush.msra.mxu0 0.0
        %1688 = vmatpush.msra.mxu0 %v1651
        %1689 = vmatmul.f32.gmra.mxu0 %v1645
        %v1690 = vpop.f32.mrf.mxu0
        %v1691 = vadd.f32 0.0, %v1690
        %1692 = vdwg.mxu0
        %v1693 = vadd.f32 %v1640, %v1671
        %v1694 = vadd.f32 %v1641, %v1691
        %s1695 = scalar_lea.vmem %s4, 28
        %v1696 = vld [vmem:[%s1695] sm:$0xf]
        %v1698 = vsel %vm628, %v1696, 0
        %v1700 = vsel %vm632, %v1261, 0
        %v1702 = vsel %vm632, %v1262, 0
        %1704 = vmatpush.msra.mxu0 0.0
        %1705 = vmatpush.msra.mxu0 0.0
        %1706 = vmatpush.msra.mxu0 0.0
        %1707 = vmatpush.msra.mxu0 0.0
        %1708 = vmatpush.msra.mxu0 0.0
        %1709 = vmatpush.msra.mxu0 0.0
        %1710 = vmatpush.msra.mxu0 0.0
        %1711 = vmatpush.msra.mxu0 0.0
        %1712 = vmatpush.msra.mxu0 0.0
        %1713 = vmatpush.msra.mxu0 0.0
        %1714 = vmatpush.msra.mxu0 0.0
        %1715 = vmatpush.msra.mxu0 0.0
        %1716 = vmatpush.msra.mxu0 0.0
        %1717 = vmatpush.msra.mxu0 0.0
        %1718 = vmatpush.msra.mxu0 0.0
        %1719 = vmatpush.msra.mxu0 %v1700
        %1720 = vmatmul.f32.gmra.mxu0 %v1698
        %v1721 = vpop.f32.mrf.mxu0
        %v1722 = vadd.f32 0.0, %v1721
        %1723 = vdwg.mxu0
        %1724 = vmatpush.msra.mxu0 0.0
        %1725 = vmatpush.msra.mxu0 0.0
        %1726 = vmatpush.msra.mxu0 0.0
        %1727 = vmatpush.msra.mxu0 0.0
        %1728 = vmatpush.msra.mxu0 0.0
        %1729 = vmatpush.msra.mxu0 0.0
        %1730 = vmatpush.msra.mxu0 0.0
        %1731 = vmatpush.msra.mxu0 0.0
        %1732 = vmatpush.msra.mxu0 0.0
        %1733 = vmatpush.msra.mxu0 0.0
        %1734 = vmatpush.msra.mxu0 0.0
        %1735 = vmatpush.msra.mxu0 0.0
        %1736 = vmatpush.msra.mxu0 0.0
        %1737 = vmatpush.msra.mxu0 0.0
        %1738 = vmatpush.msra.mxu0 0.0
        %1739 = vmatpush.msra.mxu0 %v1702
        %1740 = vmatmul.f32.gmra.mxu0 %v1698
        %v1741 = vpop.f32.mrf.mxu0
        %v1742 = vadd.f32 0.0, %v1741
        %1743 = vdwg.mxu0
        %v1744 = vadd.f32 %v1693, %v1722
        %v1745 = vadd.f32 %v1694, %v1742
        %s1746 = scalar_lea.vmem %s4, 32
        %v1747 = vld [vmem:[%s1746] sm:$0xf]
        %v1749 = vsel %vm628, %v1747, 0
        %v1752 = vsel %vm632, %v1331, 0
        %v1755 = vsel %vm632, %v1332, 0
        %1757 = vmatpush.msra.mxu0 0.0
        %1758 = vmatpush.msra.mxu0 0.0
        %1759 = vmatpush.msra.mxu0 0.0
        %1760 = vmatpush.msra.mxu0 0.0
        %1761 = vmatpush.msra.mxu0 0.0
        %1762 = vmatpush.msra.mxu0 0.0
        %1763 = vmatpush.msra.mxu0 0.0
        %1764 = vmatpush.msra.mxu0 0.0
        %1765 = vmatpush.msra.mxu0 0.0
        %1766 = vmatpush.msra.mxu0 0.0
        %1767 = vmatpush.msra.mxu0 0.0
        %1768 = vmatpush.msra.mxu0 0.0
        %1769 = vmatpush.msra.mxu0 0.0
        %1770 = vmatpush.msra.mxu0 0.0
        %1771 = vmatpush.msra.mxu0 0.0
        %1772 = vmatpush.msra.mxu0 %v1752
        %1773 = vmatmul.f32.gmra.mxu0 %v1749
        %v1774 = vpop.f32.mrf.mxu0
        %v1775 = vadd.f32 0.0, %v1774
        %1776 = vdwg.mxu0
        %1777 = vmatpush.msra.mxu0 0.0
        %1778 = vmatpush.msra.mxu0 0.0
        %1779 = vmatpush.msra.mxu0 0.0
        %1780 = vmatpush.msra.mxu0 0.0
        %1781 = vmatpush.msra.mxu0 0.0
        %1782 = vmatpush.msra.mxu0 0.0
        %1783 = vmatpush.msra.mxu0 0.0
        %1784 = vmatpush.msra.mxu0 0.0
        %1785 = vmatpush.msra.mxu0 0.0
        %1786 = vmatpush.msra.mxu0 0.0
        %1787 = vmatpush.msra.mxu0 0.0
        %1788 = vmatpush.msra.mxu0 0.0
        %1789 = vmatpush.msra.mxu0 0.0
        %1790 = vmatpush.msra.mxu0 0.0
        %1791 = vmatpush.msra.mxu0 0.0
        %1792 = vmatpush.msra.mxu0 %v1755
        %1793 = vmatmul.f32.gmra.mxu0 %v1749
        %v1794 = vpop.f32.mrf.mxu0
        %v1795 = vadd.f32 0.0, %v1794
        %1796 = vdwg.mxu0
        %v1797 = vadd.f32 %v1744, %v1775
        %v1798 = vadd.f32 %v1745, %v1795
        %v1799 = vsel %vm632, %v1797, 0.0
        %v1800 = vsel %vm632, %v1798, 0.0
        %v1801 = vadd.f32 %v1799, %v1800
        %1802 = vadd.xlane.f32.xlu0 %v1801
        %v1803 = vpop.xlane.xlu0 %1802
        %v1804 = vmul.f32 %v1797, %v1797
        %v1805 = vmul.f32 %v1798, %v1798
        %v1806 = vsel %vm632, %v1804, 0.0
        %v1807 = vsel %vm632, %v1805, 0.0
        %v1808 = vadd.f32 %v1806, %v1807
        %1809 = vadd.xlane.f32.xlu0 %v1808
        %v1810 = vpop.xlane.xlu0 %1809
        %v1811 = vmul.f32 %v1803, 0.00390625
        %v1812 = vmul.f32 %v1810, 0.00390625
        %v1813 = vmul.f32 %v1811, %v1811
        %v1814 = vsub.f32 %v1812, %v1813
        %v1815 = vmax.f32 %v1814, 0.0
        %v1816 = vsub.f32 %v1797, %v1811
        %v1817 = vsub.f32 %v1798, %v1811
        %v1818 = vadd.f32 %v1815, 1e-05
        %v1819 = vrsqrt.pop %v1818
        %v1820 = vmul.f32 %v1819, %v1818
        %v1821 = vmul.f32 %v1820, %v1819
        %v1822 = vmul.f32 0.5, %v1821
        %v1823 = vsub.f32 1.5, %v1822
        %v1824 = vmul.f32 %v1819, %v1823
        %vm1825 = vweird.f32 %v1818
        %vm1826 = vweird.f32 %v1819
        %vm1827 = vmor %vm1825, %vm1826
        %v1828 = vsel %vm1827, %v1819, %v1824
        %v1829 = vmul.f32 %v1816, %v1828
        %v1830 = vmul.f32 %v1817, %v1828
        %v1831 = vld [vmem:[%s472] sm:$0xff]
        %v1832 = vld [vmem:[%s10] sm:$0xff]
        %1834 = vset.pattern.permute.xlu0 0
        %1835 = vperm.xlu0 %1834, %v1831
        %v1836 = vpop.permute.xlu0 %1835
        %v1839 = vsel %vm628, %v1832, 0
        %v1842 = vsel %vm632, %v1829, 0
        %v1845 = vsel %vm632, %v1830, 0
        %1847 = vmatpush.msra.mxu0 0.0
        %1848 = vmatpush.msra.mxu0 0.0
        %1849 = vmatpush.msra.mxu0 0.0
        %1850 = vmatpush.msra.mxu0 0.0
        %1851 = vmatpush.msra.mxu0 0.0
        %1852 = vmatpush.msra.mxu0 0.0
        %1853 = vmatpush.msra.mxu0 0.0
        %1854 = vmatpush.msra.mxu0 0.0
        %1855 = vmatpush.msra.mxu0 0.0
        %1856 = vmatpush.msra.mxu0 0.0
        %1857 = vmatpush.msra.mxu0 0.0
        %1858 = vmatpush.msra.mxu0 0.0
        %1859 = vmatpush.msra.mxu0 0.0
        %1860 = vmatpush.msra.mxu0 0.0
        %1861 = vmatpush.msra.mxu0 0.0
        %1862 = vmatpush.msra.mxu0 %v1842
        %1863 = vmatmul.f32.gmra.mxu0 %v1839
        %v1864 = vpop.f32.mrf.mxu0
        %v1865 = vadd.f32 %v1836, %v1864
        %1866 = vdwg.mxu0
        %1867 = vmatpush.msra.mxu0 0.0
        %1868 = vmatpush.msra.mxu0 0.0
        %1869 = vmatpush.msra.mxu0 0.0
        %1870 = vmatpush.msra.mxu0 0.0
        %1871 = vmatpush.msra.mxu0 0.0
        %1872 = vmatpush.msra.mxu0 0.0
        %1873 = vmatpush.msra.mxu0 0.0
        %1874 = vmatpush.msra.mxu0 0.0
        %1875 = vmatpush.msra.mxu0 0.0
        %1876 = vmatpush.msra.mxu0 0.0
        %1877 = vmatpush.msra.mxu0 0.0
        %1878 = vmatpush.msra.mxu0 0.0
        %1879 = vmatpush.msra.mxu0 0.0
        %1880 = vmatpush.msra.mxu0 0.0
        %1881 = vmatpush.msra.mxu0 0.0
        %1882 = vmatpush.msra.mxu0 %v1845
        %1883 = vmatmul.f32.gmra.mxu0 %v1839
        %v1884 = vpop.f32.mrf.mxu0
        %v1885 = vadd.f32 %v1836, %v1884
        %1886 = vdwg.mxu0
        %v1887 = vmax.f32 %v1865, 0.0
        %v1888 = vmax.f32 %v1885, 0.0
        %v1889 = vld [vmem:[%s11] sm:$0xf]
        %v1890 = vld [vmem:[%s12] sm:$0xf]
        %1892 = vset.pattern.permute.xlu0 0
        %1893 = vperm.xlu0 %1892, %v1890
        %v1894 = vpop.permute.xlu0 %1893
        %v1897 = vsel %vm1193, %v1889, 0
        %1899 = vmatpush.msra.mxu0 0.0
        %1900 = vmatpush.msra.mxu0 0.0
        %1901 = vmatpush.msra.mxu0 0.0
        %1902 = vmatpush.msra.mxu0 0.0
        %1903 = vmatpush.msra.mxu0 0.0
        %1904 = vmatpush.msra.mxu0 0.0
        %1905 = vmatpush.msra.mxu0 0.0
        %1906 = vmatpush.msra.mxu0 0.0
        %1907 = vmatpush.msra.mxu0 0.0
        %1908 = vmatpush.msra.mxu0 0.0
        %1909 = vmatpush.msra.mxu0 0.0
        %1910 = vmatpush.msra.mxu0 0.0
        %1911 = vmatpush.msra.mxu0 0.0
        %1912 = vmatpush.msra.mxu0 0.0
        %1913 = vmatpush.msra.mxu0 0.0
        %1914 = vmatpush.msra.mxu0 %v1887
        %1915 = vmatmul.f32.gmra.mxu0 %v1897
        %v1916 = vpop.f32.mrf.mxu0
        %v1917 = vadd.f32 %v1894, %v1916
        %1918 = vdwg.mxu0
        %1919 = vmatpush.msra.mxu0 0.0
        %1920 = vmatpush.msra.mxu0 0.0
        %1921 = vmatpush.msra.mxu0 0.0
        %1922 = vmatpush.msra.mxu0 0.0
        %1923 = vmatpush.msra.mxu0 0.0
        %1924 = vmatpush.msra.mxu0 0.0
        %1925 = vmatpush.msra.mxu0 0.0
        %1926 = vmatpush.msra.mxu0 0.0
        %1927 = vmatpush.msra.mxu0 0.0
        %1928 = vmatpush.msra.mxu0 0.0
        %1929 = vmatpush.msra.mxu0 0.0
        %1930 = vmatpush.msra.mxu0 0.0
        %1931 = vmatpush.msra.mxu0 0.0
        %1932 = vmatpush.msra.mxu0 0.0
        %1933 = vmatpush.msra.mxu0 0.0
        %1934 = vmatpush.msra.mxu0 %v1888
        %1935 = vmatmul.f32.gmra.mxu0 %v1897
        %v1936 = vpop.f32.mrf.mxu0
        %v1937 = vadd.f32 %v1894, %v1936
        %1938 = vdwg.mxu0
        %v1939 = vmax.f32 %v1917, 0.0
        %v1940 = vmax.f32 %v1937, 0.0
        %1941 = vst [vmem:[#allocation1] ss:$2 sm:$0xff] %v473
        %v1942 = vld.sshfl [vmem:[#allocation1] sm:$0xff pattern:$0x75316420]
        %v1943 = vld.sshfl [vmem:[#allocation1 + $0x8] sm:$0xff pattern:$0x75316420]
        %v1946 = vadd.f32 %v1939, %v1942
        %v1947 = vadd.f32 %v1940, %v1943
        %v1950 = vrot.slane %v1947, 4
        %v1951 = vsel %vm632, %v1946, %v1950
        %1953 = vst [vmem:[%s459] sm:$0xff] %v1951
        %s1954 = sand.u32 %s323, 1
        %s1955 = scalar_lea.sflag [#allocation3], %s1954
        %s1956 = sand.u32 %s323, 1
        %s1957 = smul.addr %s1956, 8
        %s1958 = scalar_lea.vmem [#allocation2], %s1957
        // Predicated region
        $region73: #{tpu_custom_call.1} parent=71 // pred_check
          %p1959 = pneg %p333
        $region74: #{tpu_custom_call.1} parent=71 // pred_check_branch
          %1961 = sbr.rel (%p1959) target = $region76
        $region75: #{tpu_custom_call.1} parent=71 // pred_region
          %1963 = vsyncadd %s1955, 0
          %s1964 = smul.addr %s27, 2
          %s1965 = smul.addr %s1964, 4
          %s1966 = scalar_lea.hbm %s13, %s1965
          %s1968 = sshll.u32 %s1958, 4
          %s1969 = int_to_ptr.vmem [resolvable:$true] %s1968
          %s1970 = sshll.u32 %s1966, 4
          %s1971 = int_to_ptr.hbm [resolvable:$true] %s1970
          %1973 = dma.vmem_to_hbm [thread:$0]  %s1969, 128, %s1971, %s1955
        $region76: #{tpu_custom_call.1} parent=71 // pred_fallthru
          _
      $region72: #{tpu_custom_call.1} parent=5 // pred_fallthru
        _
      %p1974 = scmp.le.s32.totalorder 2, %s22
      // Predicated region
      $region77: #{tpu_custom_call.1} parent=5 // pred_check
        %p1975 = pneg %p1974
      $region78: #{tpu_custom_call.1} parent=5 // pred_check_branch
        %1977 = sbr.rel (%p1975) target = $region80
      $region79: #{tpu_custom_call.1} parent=5 // pred_region
        %s1978 = ssub.s32 %s22, 2
        // Predicated region
        $region81: #{tpu_custom_call.1} parent=79 // pred_check
          %p1979 = pneg %p339
        $region82: #{tpu_custom_call.1} parent=79 // pred_check_branch
          %1981 = sbr.rel (%p1979) target = $region84
        $region83: #{tpu_custom_call.1} parent=79 // pred_region
          %s1982 = sand.u32 %s324, 1
          %s1983 = scalar_lea.sflag [#allocation3], %s1982
          %s1984 = sand.u32 %s324, 1
          %s1985 = smul.addr %s1984, 8
          %s1986 = scalar_lea.vmem [#allocation2], %s1985
          %1988 = dma.done %s1983, 128
        $region84: #{tpu_custom_call.1} parent=79 // pred_fallthru
          _
      $region80: #{tpu_custom_call.1} parent=5 // pred_fallthru
        _
    $region6: #{tpu_custom_call.1} parent=1 // loop_footer
      %s26 = sadd.s32 1, %s22
    $region7: #{tpu_custom_call.1} parent=1 // loop_footer_branch
      %21 = sbr.rel target = $region3
    $region8: #{tpu_custom_call.1} parent=1 // loop_exit
      _
    %1989 = vsyncpa [#allocation3], 1
    %s1990 = scalar_lea.sflag [#allocation3], 1
    %1991 = vsyncpa %s1990, 1

</llo_original>
